<compile_context>
chip_gen: v6e
topology: v6e:2x2x1
jax: 0.10.0
libtpu: 0.0.40
codegen_flags: <defaults>
</compile_context>

<pallas_src>
import jax
import jax.numpy as jnp
from jax.experimental import pallas as pl
from jax.experimental.pallas import tpu as pltpu


# ----------------------------------------------------------------------------
# Fused Pallas kernel: one grid step = (batch element n, middle layer l)
# ----------------------------------------------------------------------------
def _rednet30_fused_kernel(taps_ref, res_ref, w0_ref, b0_ref,
                           w_mid_ref, b_mid_ref, w_last_ref, b_last_ref,
                           o_ref, act_ref):
    # taps_ref  : (1, Hs*Ws, 9)  f32   stride-2 tap planes of padded input
    # res_ref   : (1, Hs*Ws, 4)  f32   input residual in parity-plane layout
    # w0_ref    : (9, F)         f32   layer-0 weight
    # b0_ref    : (1, F)         f32
    # w_mid_ref : (1, 9F, F)     bf16  packed weight of middle layer l (streamed)
    # b_mid_ref : (L, 1, F)      f32   all middle-layer biases (resident)
    # w_last_ref: (4F, 4)        bf16  shift/parity-packed last-deconv weight
    # b_last_ref: (1, 4)         f32
    # o_ref     : (1, Hs*Ws, 4)  f32   output in parity-plane layout
    # act_ref   : (Hs+2, Ws+2, F) bf16 persistent padded activation scratch
    l = pl.program_id(1)
    n_mid = pl.num_programs(1)

    Hp, Wp, F = act_ref.shape
    Hs, Ws = Hp - 2, Wp - 2
    M = Hs * Ws

    # --- prologue (l == 0): Conv2d(1, F, 3, stride=2, pad=1) + ReLU --------
    @pl.when(l == 0)
    def _():
        act_ref[...] = jnp.zeros_like(act_ref)            # zero halo once per n
        a0 = jnp.dot(taps_ref[0], w0_ref[...],
                     preferred_element_type=jnp.float32)  # (M, F)
        a0 = jnp.maximum(a0 + b0_ref[...], 0.0)
        act_ref[1:Hs + 1, 1:Ws + 1, :] = a0.reshape(Hs, Ws, F).astype(jnp.bfloat16)

    # --- middle layer l: 3x3 stride-1 pad-1 conv(/transposed conv) + ReLU --
    # im2col packs all 9 taps along the contraction axis -> one MXU dot, K=9F.
    patches = [act_ref[ky:ky + Hs, kx:kx + Ws, :].reshape(M, F)
               for ky in range(3) for kx in range(3)]
    lhs = jnp.concatenate(patches, axis=-1)               # (M, 9F) bf16
    h = jnp.dot(lhs, w_mid_ref[0], preferred_element_type=jnp.float32)
    h = jnp.maximum(h + b_mid_ref[l], 0.0)                # (M, F) f32
    act_ref[1:Hs + 1, 1:Ws + 1, :] = h.reshape(Hs, Ws, F).astype(jnp.bfloat16)

    # --- epilogue (l == last): sub-pixel ConvTranspose2d(F,1,3,s=2,p=1,op=1)
    #     fused with the input residual add and the final ReLU --------------
    @pl.when(l == n_mid - 1)
    def _():
        # bottom/right zero pad of the activation == rows/cols 1..Hs+1 of the
        # halo buffer (halo is still zero).
        pats = [act_ref[1 + dh:1 + dh + Hs, 1 + dw:1 + dw + Ws, :].reshape(M, F)
                for dh in range(2) for dw in range(2)]
        lhs2 = jnp.concatenate(pats, axis=-1)             # (M, 4F) bf16
        acc = jnp.dot(lhs2, w_last_ref[...],
                      preferred_element_type=jnp.float32)  # (M, 4)
        o_ref[0] = jnp.maximum(acc + b_last_ref[...] + res_ref[0], 0.0)


# ----------------------------------------------------------------------------
# Weight packing (PyTorch conventions -> packed matrices) — run ONCE, outside
# the jitted forward.
# ----------------------------------------------------------------------------
def _pack_conv_weight(w):
    # nn.Conv2d weight (Cout, Cin, 3, 3) -> (9*Cin, Cout), (ky,kx) major.
    cout, cin = w.shape[0], w.shape[1]
    return jnp.transpose(w, (2, 3, 1, 0)).reshape(9 * cin, cout)


def _pack_deconv_weight(w):
    # nn.ConvTranspose2d weight (Cin, Cout, 3, 3); stride=1,pad=1 transposed
    # conv == stride-1 conv with spatially flipped, channel-swapped weights.
    cin, cout = w.shape[0], w.shape[1]
    w = w[:, :, ::-1, ::-1]
    return jnp.transpose(w, (2, 3, 0, 1)).reshape(9 * cin, cout)


def _pack_last_deconv(w):
    # (Cin, 1, 3, 3) -> (4*Cin, 4): rows grouped by input shift (dh,dw) in
    # {0,1}^2, columns = output parity (py,px) in {0,1}^2 (py*2+px).
    v = w[:, 0]                                   # (Cin, 3, 3)
    z = jnp.zeros_like(v[:, 0, 0])
    blocks = [
        jnp.stack([v[:, 1, 1], v[:, 1, 2], v[:, 2, 1], v[:, 2, 2]], -1),  # (0,0)
        jnp.stack([z,          v[:, 1, 0], z,          v[:, 2, 0]], -1),  # (0,1)
        jnp.stack([z,          z,          v[:, 0, 1], v[:, 0, 2]], -1),  # (1,0)
        jnp.stack([z,          z,          z,          v[:, 0, 0]], -1),  # (1,1)
    ]
    return jnp.concatenate(blocks, axis=0)        # (4*Cin, 4)


def prepare_rednet30_params(params):
    """One-time packing/casting of PyTorch-layout weights for the kernel."""
    F = params["conv_w"][0].shape[0]
    w0 = jnp.transpose(params["conv_w"][0][:, 0], (1, 2, 0)).reshape(9, F)
    b0 = params["conv_b"][0].reshape(1, F)
    w_mid = jnp.stack(
        [_pack_conv_weight(w) for w in params["conv_w"][1:]] +
        [_pack_deconv_weight(w) for w in params["deconv_w"][:-1]]
    ).astype(jnp.bfloat16)                                      # (L, 9F, F)
    b_mid = jnp.stack(list(params["conv_b"][1:]) +
                      list(params["deconv_b"][:-1]))[:, None, :]  # (L, 1, F)
    w_last = _pack_last_deconv(params["deconv_w"][-1]).astype(jnp.bfloat16)
    b_last = jnp.tile(params["deconv_b"][-1].reshape(1, 1), (1, 4))
    return dict(w0=w0, b0=b0, w_mid=w_mid, b_mid=b_mid,
                w_last=w_last, b_last=b_last)


# ----------------------------------------------------------------------------
# Parameters (deterministic synthetic init, PyTorch shapes)
# ----------------------------------------------------------------------------
def init_rednet30_params(key, num_layers=15, num_features=64):
    def uinit(k, shape, fan_in):
        bound = 1.0 / (fan_in ** 0.5)
        return jax.random.uniform(k, shape, jnp.float32, -bound, bound)

    keys = jax.random.split(key, 4 * num_layers)
    it = iter(keys)
    params = {"conv_w": [], "conv_b": [], "deconv_w": [], "deconv_b": []}

    in_ch = 1
    for _ in range(num_layers):                       # encoder convs
        params["conv_w"].append(
            uinit(next(it), (num_features, in_ch, 3, 3), in_ch * 9))
        params["conv_b"].append(uinit(next(it), (num_features,), in_ch * 9))
        in_ch = num_features

    for i in range(num_layers):                       # decoder deconvs
        out_ch = 1 if i == num_layers - 1 else num_features
        params["deconv_w"].append(
            uinit(next(it), (num_features, out_ch, 3, 3), num_features * 9))
        params["deconv_b"].append(
            uinit(next(it), (out_ch,), num_features * 9))
    return params


# ----------------------------------------------------------------------------
# Forward pass (matches REDNet30.forward semantics; weights pre-packed)
# ----------------------------------------------------------------------------
def rednet30_forward(x_nchw, packed):
    x = jnp.transpose(x_nchw, (0, 2, 3, 1)).astype(jnp.float32)   # -> NHWC
    N, H, W, _ = x.shape
    assert H % 2 == 0 and W % 2 == 0
    Hs, Ws = H // 2, W // 2
    M = Hs * Ws
    F = packed["w0"].shape[-1]
    L = packed["w_mid"].shape[0]
    x2d = x[..., 0]                                   # (N, H, W) residual src

    # Stride-2 tap planes of the padded 1-channel input (layer-0 operand) and
    # the residual in parity-plane layout.  Tiny one-time XLA glue.
    xp = jnp.pad(x2d, ((0, 0), (1, 1), (1, 1)))
    taps = jnp.stack(
        [xp[:, ky::2, kx::2][:, :Hs, :Ws] for ky in range(3) for kx in range(3)],
        axis=-1).reshape(N, M, 9)
    res_p = jnp.stack([x2d[:, 0::2, 0::2], x2d[:, 0::2, 1::2],
                       x2d[:, 1::2, 0::2], x2d[:, 1::2, 1::2]],
                      axis=-1).reshape(N, M, 4)

    out_p = pl.pallas_call(
        _rednet30_fused_kernel,
        out_shape=jax.ShapeDtypeStruct((N, M, 4), jnp.float32),
        grid=(N, L),
        in_specs=[
            pl.BlockSpec((1, M, 9), lambda n, l: (n, 0, 0)),          # taps
            pl.BlockSpec((1, M, 4), lambda n, l: (n, 0, 0)),          # residual
            pl.BlockSpec((9, F), lambda n, l: (0, 0)),                # w0
            pl.BlockSpec((1, F), lambda n, l: (0, 0)),                # b0
            pl.BlockSpec((1, 9 * F, F), lambda n, l: (l, 0, 0)),      # w_mid (streamed/layer)
            pl.BlockSpec((L, 1, F), lambda n, l: (0, 0, 0)),          # b_mid (resident)
            pl.BlockSpec((4 * F, 4), lambda n, l: (0, 0)),            # w_last
            pl.BlockSpec((1, 4), lambda n, l: (0, 0)),                # b_last
        ],
        out_specs=pl.BlockSpec((1, M, 4), lambda n, l: (n, 0, 0)),
        scratch_shapes=[pltpu.VMEM((Hs + 2, Ws + 2, F), jnp.bfloat16)],
        compiler_params=pltpu.CompilerParams(
            dimension_semantics=("parallel", "arbitrary")),
    )(taps, res_p, packed["w0"], packed["b0"],
      packed["w_mid"], packed["b_mid"], packed["w_last"], packed["b_last"])

    # 2x2 pixel shuffle of the parity planes back to (N, H, W) -- tiny glue.
    out = out_p.reshape(N, Hs, Ws, 2, 2)
    out = jnp.transpose(out, (0, 1, 3, 2, 4)).reshape(N, H, W)
    return out[:, None, :, :]                                # -> NCHW


# ----------------------------------------------------------------------------
if __name__ == "__main__":
    key = jax.random.PRNGKey(0)
    pkey, xkey = jax.random.split(key)

    num_layers, num_features = 15, 64            # module defaults
    params = init_rednet30_params(pkey, num_layers, num_features)
    packed = prepare_rednet30_params(params)     # one-time weight packing

    # PyTorch-style NCHW input: (batch=2, channels=1, 16, 16)
    x = jax.random.normal(xkey, (2, 1, 16, 16), jnp.float32)

    fwd = jax.jit(rednet30_forward)
    out = fwd(x, packed)
    jax.block_until_ready(out)

    assert out.shape == (2, 1, 16, 16), out.shape
    assert out.dtype == jnp.float32
    assert bool(jnp.all(out >= 0.0))             # final ReLU
    print("KERNEL_OK")
</pallas_src>

<mosaic_0001>
module attributes {stable_mosaic.version = 11 : i64} {
  func.func @_rednet30_fused_kernel(%arg0: i32, %arg1: i32, %arg2: memref<1x64x9xf32, #tpu.memory_space<vmem>>, %arg3: memref<1x64x4xf32, #tpu.memory_space<vmem>>, %arg4: memref<9x64xf32, #tpu.memory_space<vmem>>, %arg5: memref<1x64xf32, #tpu.memory_space<vmem>>, %arg6: memref<1x576x64xbf16, #tpu.memory_space<vmem>>, %arg7: memref<28x1x64xf32, #tpu.memory_space<vmem>>, %arg8: memref<256x4xbf16, #tpu.memory_space<vmem>>, %arg9: memref<1x4xf32, #tpu.memory_space<vmem>>, %arg10: memref<1x64x4xf32, #tpu.memory_space<vmem>>, %arg11: memref<10x10x64xbf16, #tpu.memory_space<vmem>>) attributes {dimension_semantics = [#tpu.dimension_semantics<parallel>, #tpu.dimension_semantics<arbitrary>], iteration_bounds = array<i64: 2, 28>, scalar_prefetch = 0 : i64, scratch_operands = 1 : i64, tpu.core_type = #tpu.core_type<tc>, window_params = [{transform_indices = @transform_0, window_bounds = array<i64: 1, 64, 9>}, {transform_indices = @transform_1, window_bounds = array<i64: 1, 64, 4>}, {pipeline_mode = #tpu.pipeline_mode<synchronous>, transform_indices = @transform_2, window_bounds = array<i64: 9, 64>}, {pipeline_mode = #tpu.pipeline_mode<synchronous>, transform_indices = @transform_3, window_bounds = array<i64: 1, 64>}, {transform_indices = @transform_4, window_bounds = array<i64: 1, 576, 64>}, {pipeline_mode = #tpu.pipeline_mode<synchronous>, transform_indices = @transform_5, window_bounds = array<i64: 28, 1, 64>}, {pipeline_mode = #tpu.pipeline_mode<synchronous>, transform_indices = @transform_6, window_bounds = array<i64: 256, 4>}, {pipeline_mode = #tpu.pipeline_mode<synchronous>, transform_indices = @transform_7, window_bounds = array<i64: 1, 4>}, {transform_indices = @transform_8, window_bounds = array<i64: 1, 64, 4>}]} {
    %c0_i32 = arith.constant 0 : i32
    %0 = arith.cmpi eq, %arg1, %c0_i32 : i32
    %1 = arith.extui %0 : i1 to i32
    %c0_i32_0 = arith.constant 0 : i32
    %2 = arith.cmpi ne, %1, %c0_i32_0 : i32
    scf.if %2 {
      %cst_35 = arith.constant 0.000000e+00 : bf16
      %38 = vector.broadcast %cst_35 : bf16 to vector<10x10x64xbf16>
      %c0_36 = arith.constant 0 : index
      %c0_37 = arith.constant 0 : index
      %c0_38 = arith.constant 0 : index
      %39 = vector.load %arg11[%c0_36, %c0_37, %c0_38] : memref<10x10x64xbf16, #tpu.memory_space<vmem>>, vector<10x10x64xbf16>
      tpu.vector_store %arg11[%c0_36, %c0_37, %c0_38], %38 {strides = array<i32>} : memref<10x10x64xbf16, #tpu.memory_space<vmem>>, vector<10x10x64xbf16>,
      %c0_39 = arith.constant 0 : index
      %c0_40 = arith.constant 0 : index
      %c0_41 = arith.constant 0 : index
      %40 = vector.load %arg2[%c0_39, %c0_40, %c0_41] : memref<1x64x9xf32, #tpu.memory_space<vmem>>, vector<1x64x9xf32>
      %41 = vector.shape_cast %40 : vector<1x64x9xf32> to vector<64x9xf32>
      %c0_42 = arith.constant 0 : index
      %c0_43 = arith.constant 0 : index
      %42 = vector.load %arg4[%c0_42, %c0_43] : memref<9x64xf32, #tpu.memory_space<vmem>>, vector<9x64xf32>
      %cst_44 = arith.constant dense<0.000000e+00> : vector<64x64xf32>
      %43 = tpu.matmul %41, %42, %cst_44 {dimension_numbers = #tpu.dot_dimension_numbers<[1], [0], [0], [1], [0, 0, 1, 1], [], []>} : vector<64x9xf32>, vector<9x64xf32>, vector<64x64xf32> -> vector<64x64xf32>
      %c0_45 = arith.constant 0 : index
      %c0_46 = arith.constant 0 : index
      %44 = vector.load %arg5[%c0_45, %c0_46] : memref<1x64xf32, #tpu.memory_space<vmem>>, vector<1x64xf32>
      %45 = vector.broadcast %44 : vector<1x64xf32> to vector<64x64xf32>
      %46 = arith.addf %43, %45 : vector<64x64xf32>
      %cst_47 = arith.constant 0.000000e+00 : f32
      %47 = vector.broadcast %cst_47 : f32 to vector<64x64xf32>
      %48 = arith.maximumf %46, %47 : vector<64x64xf32>
      %49 = vector.shape_cast %48 : vector<64x64xf32> to vector<8x8x64xf32>
      %50 = arith.truncf %49 : vector<8x8x64xf32> to vector<8x8x64xbf16>
      %c1_48 = arith.constant 1 : index
      %c1_49 = arith.constant 1 : index
      %c0_50 = arith.constant 0 : index
      %51 = vector.load %arg11[%c1_48, %c1_49, %c0_50] : memref<10x10x64xbf16, #tpu.memory_space<vmem>>, vector<8x8x64xbf16>
      tpu.vector_store %arg11[%c1_48, %c1_49, %c0_50], %50 {strides = array<i32>} : memref<10x10x64xbf16, #tpu.memory_space<vmem>>, vector<8x8x64xbf16>,
    } else {
    }
    %c0 = arith.constant 0 : index
    %c0_1 = arith.constant 0 : index
    %c0_2 = arith.constant 0 : index
    %3 = vector.load %arg11[%c0, %c0_1, %c0_2] : memref<10x10x64xbf16, #tpu.memory_space<vmem>>, vector<8x8x64xbf16>
    %4 = vector.shape_cast %3 : vector<8x8x64xbf16> to vector<64x64xbf16>
    %c0_3 = arith.constant 0 : index
    %c1 = arith.constant 1 : index
    %c0_4 = arith.constant 0 : index
    %5 = vector.load %arg11[%c0_3, %c1, %c0_4] : memref<10x10x64xbf16, #tpu.memory_space<vmem>>, vector<8x8x64xbf16>
    %6 = vector.shape_cast %5 : vector<8x8x64xbf16> to vector<64x64xbf16>
    %c0_5 = arith.constant 0 : index
    %c2 = arith.constant 2 : index
    %c0_6 = arith.constant 0 : index
    %7 = vector.load %arg11[%c0_5, %c2, %c0_6] : memref<10x10x64xbf16, #tpu.memory_space<vmem>>, vector<8x8x64xbf16>
    %8 = vector.shape_cast %7 : vector<8x8x64xbf16> to vector<64x64xbf16>
    %c1_7 = arith.constant 1 : index
    %c0_8 = arith.constant 0 : index
    %c0_9 = arith.constant 0 : index
    %9 = vector.load %arg11[%c1_7, %c0_8, %c0_9] : memref<10x10x64xbf16, #tpu.memory_space<vmem>>, vector<8x8x64xbf16>
    %10 = vector.shape_cast %9 : vector<8x8x64xbf16> to vector<64x64xbf16>
    %c1_10 = arith.constant 1 : index
    %c1_11 = arith.constant 1 : index
    %c0_12 = arith.constant 0 : index
    %11 = vector.load %arg11[%c1_10, %c1_11, %c0_12] : memref<10x10x64xbf16, #tpu.memory_space<vmem>>, vector<8x8x64xbf16>
    %12 = vector.shape_cast %11 : vector<8x8x64xbf16> to vector<64x64xbf16>
    %c1_13 = arith.constant 1 : index
    %c2_14 = arith.constant 2 : index
    %c0_15 = arith.constant 0 : index
    %13 = vector.load %arg11[%c1_13, %c2_14, %c0_15] : memref<10x10x64xbf16, #tpu.memory_space<vmem>>, vector<8x8x64xbf16>
    %14 = vector.shape_cast %13 : vector<8x8x64xbf16> to vector<64x64xbf16>
    %c2_16 = arith.constant 2 : index
    %c0_17 = arith.constant 0 : index
    %c0_18 = arith.constant 0 : index
    %15 = vector.load %arg11[%c2_16, %c0_17, %c0_18] : memref<10x10x64xbf16, #tpu.memory_space<vmem>>, vector<8x8x64xbf16>
    %16 = vector.shape_cast %15 : vector<8x8x64xbf16> to vector<64x64xbf16>
    %c2_19 = arith.constant 2 : index
    %c1_20 = arith.constant 1 : index
    %c0_21 = arith.constant 0 : index
    %17 = vector.load %arg11[%c2_19, %c1_20, %c0_21] : memref<10x10x64xbf16, #tpu.memory_space<vmem>>, vector<8x8x64xbf16>
    %18 = vector.shape_cast %17 : vector<8x8x64xbf16> to vector<64x64xbf16>
    %c2_22 = arith.constant 2 : index
    %c2_23 = arith.constant 2 : index
    %c0_24 = arith.constant 0 : index
    %19 = vector.load %arg11[%c2_22, %c2_23, %c0_24] : memref<10x10x64xbf16, #tpu.memory_space<vmem>>, vector<8x8x64xbf16>
    %20 = vector.shape_cast %19 : vector<8x8x64xbf16> to vector<64x64xbf16>
    %21 = tpu.concatenate %4, %6, %8, %10, %12, %14, %16, %18, %20 in 1 : vector<64x64xbf16>, vector<64x64xbf16>, vector<64x64xbf16>, vector<64x64xbf16>, vector<64x64xbf16>, vector<64x64xbf16>, vector<64x64xbf16>, vector<64x64xbf16>, vector<64x64xbf16> -> vector<64x576xbf16>
    %c0_25 = arith.constant 0 : index
    %c0_26 = arith.constant 0 : index
    %c0_27 = arith.constant 0 : index
    %22 = vector.load %arg6[%c0_25, %c0_26, %c0_27] : memref<1x576x64xbf16, #tpu.memory_space<vmem>>, vector<1x576x64xbf16>
    %23 = vector.shape_cast %22 : vector<1x576x64xbf16> to vector<576x64xbf16>
    %cst = arith.constant dense<0.000000e+00> : vector<64x64xf32>
    %24 = tpu.matmul %21, %23, %cst {dimension_numbers = #tpu.dot_dimension_numbers<[1], [0], [0], [1], [0, 0, 1, 1], [], []>} : vector<64x576xbf16>, vector<576x64xbf16>, vector<64x64xf32> -> vector<64x64xf32>
    %25 = arith.index_cast %arg1 : i32 to index
    %c0_28 = arith.constant 0 : index
    %c0_29 = arith.constant 0 : index
    %26 = vector.load %arg7[%25, %c0_28, %c0_29] : memref<28x1x64xf32, #tpu.memory_space<vmem>>, vector<1x1x64xf32>
    %27 = vector.shape_cast %26 : vector<1x1x64xf32> to vector<1x64xf32>
    %28 = vector.broadcast %27 : vector<1x64xf32> to vector<64x64xf32>
    %29 = arith.addf %24, %28 : vector<64x64xf32>
    %cst_30 = arith.constant 0.000000e+00 : f32
    %30 = vector.broadcast %cst_30 : f32 to vector<64x64xf32>
    %31 = arith.maximumf %29, %30 : vector<64x64xf32>
    %32 = vector.shape_cast %31 : vector<64x64xf32> to vector<8x8x64xf32>
    %33 = arith.truncf %32 : vector<8x8x64xf32> to vector<8x8x64xbf16>
    %c1_31 = arith.constant 1 : index
    %c1_32 = arith.constant 1 : index
    %c0_33 = arith.constant 0 : index
    %34 = vector.load %arg11[%c1_31, %c1_32, %c0_33] : memref<10x10x64xbf16, #tpu.memory_space<vmem>>, vector<8x8x64xbf16>
    tpu.vector_store %arg11[%c1_31, %c1_32, %c0_33], %33 {strides = array<i32>} : memref<10x10x64xbf16, #tpu.memory_space<vmem>>, vector<8x8x64xbf16>,
    %c27_i32 = arith.constant 27 : i32
    %35 = arith.cmpi eq, %arg1, %c27_i32 : i32
    %36 = arith.extui %35 : i1 to i32
    %c0_i32_34 = arith.constant 0 : i32
    %37 = arith.cmpi ne, %36, %c0_i32_34 : i32
    scf.if %37 {
      %c1_35 = arith.constant 1 : index
      %c1_36 = arith.constant 1 : index
      %c0_37 = arith.constant 0 : index
      %38 = vector.load %arg11[%c1_35, %c1_36, %c0_37] : memref<10x10x64xbf16, #tpu.memory_space<vmem>>, vector<8x8x64xbf16>
      %39 = vector.shape_cast %38 : vector<8x8x64xbf16> to vector<64x64xbf16>
      %c1_38 = arith.constant 1 : index
      %c2_39 = arith.constant 2 : index
      %c0_40 = arith.constant 0 : index
      %40 = vector.load %arg11[%c1_38, %c2_39, %c0_40] : memref<10x10x64xbf16, #tpu.memory_space<vmem>>, vector<8x8x64xbf16>
      %41 = vector.shape_cast %40 : vector<8x8x64xbf16> to vector<64x64xbf16>
      %c2_41 = arith.constant 2 : index
      %c1_42 = arith.constant 1 : index
      %c0_43 = arith.constant 0 : index
      %42 = vector.load %arg11[%c2_41, %c1_42, %c0_43] : memref<10x10x64xbf16, #tpu.memory_space<vmem>>, vector<8x8x64xbf16>
      %43 = vector.shape_cast %42 : vector<8x8x64xbf16> to vector<64x64xbf16>
      %c2_44 = arith.constant 2 : index
      %c2_45 = arith.constant 2 : index
      %c0_46 = arith.constant 0 : index
      %44 = vector.load %arg11[%c2_44, %c2_45, %c0_46] : memref<10x10x64xbf16, #tpu.memory_space<vmem>>, vector<8x8x64xbf16>
      %45 = vector.shape_cast %44 : vector<8x8x64xbf16> to vector<64x64xbf16>
      %46 = tpu.concatenate %39, %41, %43, %45 in 1 : vector<64x64xbf16>, vector<64x64xbf16>, vector<64x64xbf16>, vector<64x64xbf16> -> vector<64x256xbf16>
      %c0_47 = arith.constant 0 : index
      %c0_48 = arith.constant 0 : index
      %47 = vector.load %arg8[%c0_47, %c0_48] : memref<256x4xbf16, #tpu.memory_space<vmem>>, vector<256x4xbf16>
      %cst_49 = arith.constant dense<0.000000e+00> : vector<64x4xf32>
      %48 = tpu.matmul %46, %47, %cst_49 {dimension_numbers = #tpu.dot_dimension_numbers<[1], [0], [0], [1], [0, 0, 1, 1], [], []>} : vector<64x256xbf16>, vector<256x4xbf16>, vector<64x4xf32> -> vector<64x4xf32>
      %c0_50 = arith.constant 0 : index
      %c0_51 = arith.constant 0 : index
      %49 = vector.load %arg9[%c0_50, %c0_51] : memref<1x4xf32, #tpu.memory_space<vmem>>, vector<1x4xf32>
      %50 = vector.broadcast %49 : vector<1x4xf32> to vector<64x4xf32>
      %51 = arith.addf %48, %50 : vector<64x4xf32>
      %c0_52 = arith.constant 0 : index
      %c0_53 = arith.constant 0 : index
      %c0_54 = arith.constant 0 : index
      %52 = vector.load %arg3[%c0_52, %c0_53, %c0_54] : memref<1x64x4xf32, #tpu.memory_space<vmem>>, vector<1x64x4xf32>
      %53 = vector.shape_cast %52 : vector<1x64x4xf32> to vector<64x4xf32>
      %54 = arith.addf %51, %53 : vector<64x4xf32>
      %cst_55 = arith.constant 0.000000e+00 : f32
      %55 = vector.broadcast %cst_55 : f32 to vector<64x4xf32>
      %56 = arith.maximumf %54, %55 : vector<64x4xf32>
      %c0_56 = arith.constant 0 : index
      %c0_57 = arith.constant 0 : index
      %c0_58 = arith.constant 0 : index
      %57 = vector.load %arg10[%c0_56, %c0_57, %c0_58] : memref<1x64x4xf32, #tpu.memory_space<vmem>>, vector<1x64x4xf32>
      %58 = vector.shape_cast %57 : vector<1x64x4xf32> to vector<64x4xf32>
      %59 = vector.shape_cast %56 : vector<64x4xf32> to vector<1x64x4xf32>
      tpu.vector_store %arg10[%c0_56, %c0_57, %c0_58], %59 {strides = array<i32>} : memref<1x64x4xf32, #tpu.memory_space<vmem>>, vector<1x64x4xf32>,
    } else {
    }
    return
  }
  func.func @transform_0(%arg0: i32, %arg1: i32) -> (i32, i32, i32) {
    %c0_i32 = arith.constant 0 : i32
    %c0_i32_0 = arith.constant 0 : i32
    %c0_i32_1 = arith.constant 0 : i32
    return %arg0, %c0_i32, %c0_i32_0 : i32, i32, i32
  }
  func.func @transform_1(%arg0: i32, %arg1: i32) -> (i32, i32, i32) {
    %c0_i32 = arith.constant 0 : i32
    %c0_i32_0 = arith.constant 0 : i32
    %c0_i32_1 = arith.constant 0 : i32
    return %arg0, %c0_i32, %c0_i32_0 : i32, i32, i32
  }
  func.func @transform_2(%arg0: i32, %arg1: i32) -> (i32, i32) {
    %c0_i32 = arith.constant 0 : i32
    %c0_i32_0 = arith.constant 0 : i32
    %c0_i32_1 = arith.constant 0 : i32
    return %c0_i32, %c0_i32_0 : i32, i32
  }
  func.func @transform_3(%arg0: i32, %arg1: i32) -> (i32, i32) {
    %c0_i32 = arith.constant 0 : i32
    %c0_i32_0 = arith.constant 0 : i32
    %c0_i32_1 = arith.constant 0 : i32
    return %c0_i32, %c0_i32_0 : i32, i32
  }
  func.func @transform_4(%arg0: i32, %arg1: i32) -> (i32, i32, i32) {
    %c0_i32 = arith.constant 0 : i32
    %c0_i32_0 = arith.constant 0 : i32
    %c0_i32_1 = arith.constant 0 : i32
    return %arg1, %c0_i32, %c0_i32_0 : i32, i32, i32
  }
  func.func @transform_5(%arg0: i32, %arg1: i32) -> (i32, i32, i32) {
    %c0_i32 = arith.constant 0 : i32
    %c0_i32_0 = arith.constant 0 : i32
    %c0_i32_1 = arith.constant 0 : i32
    %c0_i32_2 = arith.constant 0 : i32
    return %c0_i32, %c0_i32_0, %c0_i32_1 : i32, i32, i32
  }
  func.func @transform_6(%arg0: i32, %arg1: i32) -> (i32, i32) {
    %c0_i32 = arith.constant 0 : i32
    %c0_i32_0 = arith.constant 0 : i32
    %c0_i32_1 = arith.constant 0 : i32
    return %c0_i32, %c0_i32_0 : i32, i32
  }
  func.func @transform_7(%arg0: i32, %arg1: i32) -> (i32, i32) {
    %c0_i32 = arith.constant 0 : i32
    %c0_i32_0 = arith.constant 0 : i32
    %c0_i32_1 = arith.constant 0 : i32
    return %c0_i32, %c0_i32_0 : i32, i32
  }
  func.func @transform_8(%arg0: i32, %arg1: i32) -> (i32, i32, i32) {
    %c0_i32 = arith.constant 0 : i32
    %c0_i32_0 = arith.constant 0 : i32
    %c0_i32_1 = arith.constant 0 : i32
    return %arg0, %c0_i32, %c0_i32_0 : i32, i32, i32
  }
}

</mosaic_0001>

<llo_original>
// kernel: rednet30_forward.1
$region0: #{rednet30_forward.1}
  #allocation0 [shape = 'u32[]', space=smem, size = 0x4, offset = 0x4, fixed_abs, tag = 'smem constant byte address 0x4 - core index']
  #allocation1 [shape = 'u32[144,128]{1,0:T(1,128)}', space=vmem, size = 0x12000, scoped, tag = 'internal scratch']
  #allocation2 [shape = 'bf16[10,10,64]{2,1,0:T(8,128)(2,1)}', space=vmem, size = 0xa000, scoped, tag = 'scratch operand']
  %s0 = inlined_call_operand.vmem [shape: f32[2,64,9], index: 0, kind: input, shape index: {}]
  %s1 = inlined_call_operand.vmem [shape: f32[2,64,4], index: 1, kind: input, shape index: {}]
  %s2 = inlined_call_operand.vmem [shape: f32[9,64], index: 2, kind: input, shape index: {}]
  %s3 = inlined_call_operand.vmem [shape: f32[1,64], index: 3, kind: input, shape index: {}]
  %s4 = inlined_call_operand.vmem [shape: bf16[28,576,64], index: 4, kind: input, shape index: {}]
  %s5 = inlined_call_operand.vmem [shape: f32[28,1,64], index: 5, kind: input, shape index: {}]
  %s6 = inlined_call_operand.vmem [shape: bf16[256,4], index: 6, kind: input, shape index: {}]
  %s7 = inlined_call_operand.vmem [shape: f32[1,4], index: 7, kind: input, shape index: {}]
  %s8 = inlined_call_operand.vmem [shape: f32[2,64,4], index: 8, kind: output, shape index: {}]
  %s9 = sld [smem:[#allocation0]]
  $region73: #{rednet30_forward.1} parent=0
    _
  %s11 = ssub.s32 1, %s9
  %s12 = scalar_select 0, %s11, %s9
  loop: start=0, step=1, limit=58
  $region2: #{rednet30_forward.1} parent=0 // loop_pre_header
    _
  $region3: #{rednet30_forward.1} parent=0 // loop_header
    %s14 = sphi 0, %s18
    %p15 = scmp.ge.s32.totalorder %s14, 58
    %s21 = sphi 0, %s33
    %s22 = sphi 0, %s29
    %s23 = sphi 0, %s21
    %s24 = sphi 0, %s22
    %s25 = sphi 0, %s23
    %s26 = sphi 0, %s24
    %s36 = sphi 0, %s38
    %s39 = sphi 0, %s36
    %s40 = sphi 0, %s39
    %s56 = sphi 0, %s40
    %s62 = sphi 0, %s64
    %s65 = sphi 0, %s62
    %s66 = sphi 0, %s65
    %s82 = sphi 0, %s66
    %s86 = sphi 0, %s86
    %s88 = sphi 0, %s86
    %s89 = sphi 0, %s88
    %s103 = sphi 0, %s89
    %s107 = sphi 0, %s107
    %s109 = sphi 0, %s107
    %s110 = sphi 0, %s109
    %s124 = sphi 0, %s110
    %s130 = sphi 0, %s132
    %s133 = sphi 0, %s130
    %s134 = sphi 0, %s133
    %s150 = sphi 0, %s134
    %s154 = sphi 0, %s154
    %s156 = sphi 0, %s154
    %s157 = sphi 0, %s156
    %s171 = sphi 0, %s157
    %s175 = sphi 0, %s175
    %s177 = sphi 0, %s175
    %s178 = sphi 0, %s177
    %s192 = sphi 0, %s178
    %s196 = sphi 0, %s196
    %s198 = sphi 0, %s196
    %s199 = sphi 0, %s198
    %s213 = sphi 0, %s199
    %s219 = sphi 0, %s221
    %s222 = sphi 0, %s219
    %s223 = sphi 0, %s222
    %s239 = sphi 0, %s223
  $region4: #{rednet30_forward.1} parent=0 // loop_header_branch
    %17 = sbr.rel (%p15) target = $region8
  $region5: #{rednet30_forward.1} parent=0 // loop_body
    %s19 = ssub.s32 %s14, 1
    %s20 = ssub.s32 %s14, 2
    %s27 = sadd.s32 1, %s22
    %p28 = scmp.ge.s32.totalorder %s27, 28
    %s29 = scalar_select %p28, 0, %s27
    %s30 = sadd.s32 1, %s21
    %s31 = scalar_select %p28, %s30, %s21
    %p32 = scmp.ge.s32.totalorder %s31, 2
    %s33 = scalar_select %p32, 0, %s31
    %s34 = ssub.s32 %s21, %s33
    %p35 = scmp.eq.s32.totalorder %s34, 0
    %s37 = sadd.s32 %s36, 1
    %s38 = scalar_select %p35, %s36, %s37
    %p41 = pneg %p35
    %p42 = scmp.eq.s32.totalorder %s14, 55
    %p43 = por %p41, %p42
    %p44 = scmp.ne.s32.totalorder %s36, %s39
    %p45 = scmp.eq.s32.totalorder %s14, 0
    %p46 = por %p44, %p45
    %p47 = scmp.ne.s32.totalorder %s36, %s39
    %p48 = scmp.eq.s32.totalorder %s19, 55
    %p49 = por %p47, %p48
    %p50 = scmp.ne.s32.totalorder %s39, %s40
    %p51 = scmp.eq.s32.totalorder %s19, 0
    %p52 = por %p50, %p51
    %p53 = scmp.ne.s32.totalorder %s39, %s40
    %p54 = scmp.eq.s32.totalorder %s20, 55
    %p55 = por %p53, %p54
    %p57 = scmp.ne.s32.totalorder %s40, %s56
    %p58 = scmp.eq.s32.totalorder %s20, 0
    %p59 = por %p57, %p58
    %s60 = ssub.s32 %s21, %s33
    %p61 = scmp.eq.s32.totalorder %s60, 0
    %s63 = sadd.s32 %s62, 1
    %s64 = scalar_select %p61, %s62, %s63
    %p67 = pneg %p61
    %p68 = scmp.eq.s32.totalorder %s14, 55
    %p69 = por %p67, %p68
    %p70 = scmp.ne.s32.totalorder %s62, %s65
    %p71 = scmp.eq.s32.totalorder %s14, 0
    %p72 = por %p70, %p71
    %p73 = scmp.ne.s32.totalorder %s62, %s65
    %p74 = scmp.eq.s32.totalorder %s19, 55
    %p75 = por %p73, %p74
    %p76 = scmp.ne.s32.totalorder %s65, %s66
    %p77 = scmp.eq.s32.totalorder %s19, 0
    %p78 = por %p76, %p77
    %p79 = scmp.ne.s32.totalorder %s65, %s66
    %p80 = scmp.eq.s32.totalorder %s20, 55
    %p81 = por %p79, %p80
    %p83 = scmp.ne.s32.totalorder %s66, %s82
    %p84 = scmp.eq.s32.totalorder %s20, 0
    %p85 = por %p83, %p84
    %s87 = sadd.s32 %s86, 1
    %p90 = scmp.eq.s32.totalorder %s14, 55
    %p91 = scmp.ne.s32.totalorder %s86, %s88
    %p92 = scmp.eq.s32.totalorder %s14, 0
    %p93 = por %p91, %p92
    %p94 = scmp.ne.s32.totalorder %s86, %s88
    %p95 = scmp.eq.s32.totalorder %s19, 55
    %p96 = por %p94, %p95
    %p97 = scmp.ne.s32.totalorder %s88, %s89
    %p98 = scmp.eq.s32.totalorder %s19, 0
    %p99 = por %p97, %p98
    %p100 = scmp.ne.s32.totalorder %s88, %s89
    %p101 = scmp.eq.s32.totalorder %s20, 55
    %p102 = por %p100, %p101
    %p104 = scmp.ne.s32.totalorder %s89, %s103
    %p105 = scmp.eq.s32.totalorder %s20, 0
    %p106 = por %p104, %p105
    %s108 = sadd.s32 %s107, 1
    %p111 = scmp.eq.s32.totalorder %s14, 55
    %p112 = scmp.ne.s32.totalorder %s107, %s109
    %p113 = scmp.eq.s32.totalorder %s14, 0
    %p114 = por %p112, %p113
    %p115 = scmp.ne.s32.totalorder %s107, %s109
    %p116 = scmp.eq.s32.totalorder %s19, 55
    %p117 = por %p115, %p116
    %p118 = scmp.ne.s32.totalorder %s109, %s110
    %p119 = scmp.eq.s32.totalorder %s19, 0
    %p120 = por %p118, %p119
    %p121 = scmp.ne.s32.totalorder %s109, %s110
    %p122 = scmp.eq.s32.totalorder %s20, 55
    %p123 = por %p121, %p122
    %p125 = scmp.ne.s32.totalorder %s110, %s124
    %p126 = scmp.eq.s32.totalorder %s20, 0
    %p127 = por %p125, %p126
    %s128 = ssub.s32 %s22, %s29
    %p129 = scmp.eq.s32.totalorder %s128, 0
    %s131 = sadd.s32 %s130, 1
    %s132 = scalar_select %p129, %s130, %s131
    %p135 = pneg %p129
    %p136 = scmp.eq.s32.totalorder %s14, 55
    %p137 = por %p135, %p136
    %p138 = scmp.ne.s32.totalorder %s130, %s133
    %p139 = scmp.eq.s32.totalorder %s14, 0
    %p140 = por %p138, %p139
    %p141 = scmp.ne.s32.totalorder %s130, %s133
    %p142 = scmp.eq.s32.totalorder %s19, 55
    %p143 = por %p141, %p142
    %p144 = scmp.ne.s32.totalorder %s133, %s134
    %p145 = scmp.eq.s32.totalorder %s19, 0
    %p146 = por %p144, %p145
    %p147 = scmp.ne.s32.totalorder %s133, %s134
    %p148 = scmp.eq.s32.totalorder %s20, 55
    %p149 = por %p147, %p148
    %p151 = scmp.ne.s32.totalorder %s134, %s150
    %p152 = scmp.eq.s32.totalorder %s20, 0
    %p153 = por %p151, %p152
    %s155 = sadd.s32 %s154, 1
    %p158 = scmp.eq.s32.totalorder %s14, 55
    %p159 = scmp.ne.s32.totalorder %s154, %s156
    %p160 = scmp.eq.s32.totalorder %s14, 0
    %p161 = por %p159, %p160
    %p162 = scmp.ne.s32.totalorder %s154, %s156
    %p163 = scmp.eq.s32.totalorder %s19, 55
    %p164 = por %p162, %p163
    %p165 = scmp.ne.s32.totalorder %s156, %s157
    %p166 = scmp.eq.s32.totalorder %s19, 0
    %p167 = por %p165, %p166
    %p168 = scmp.ne.s32.totalorder %s156, %s157
    %p169 = scmp.eq.s32.totalorder %s20, 55
    %p170 = por %p168, %p169
    %p172 = scmp.ne.s32.totalorder %s157, %s171
    %p173 = scmp.eq.s32.totalorder %s20, 0
    %p174 = por %p172, %p173
    %s176 = sadd.s32 %s175, 1
    %p179 = scmp.eq.s32.totalorder %s14, 55
    %p180 = scmp.ne.s32.totalorder %s175, %s177
    %p181 = scmp.eq.s32.totalorder %s14, 0
    %p182 = por %p180, %p181
    %p183 = scmp.ne.s32.totalorder %s175, %s177
    %p184 = scmp.eq.s32.totalorder %s19, 55
    %p185 = por %p183, %p184
    %p186 = scmp.ne.s32.totalorder %s177, %s178
    %p187 = scmp.eq.s32.totalorder %s19, 0
    %p188 = por %p186, %p187
    %p189 = scmp.ne.s32.totalorder %s177, %s178
    %p190 = scmp.eq.s32.totalorder %s20, 55
    %p191 = por %p189, %p190
    %p193 = scmp.ne.s32.totalorder %s178, %s192
    %p194 = scmp.eq.s32.totalorder %s20, 0
    %p195 = por %p193, %p194
    %s197 = sadd.s32 %s196, 1
    %p200 = scmp.eq.s32.totalorder %s14, 55
    %p201 = scmp.ne.s32.totalorder %s196, %s198
    %p202 = scmp.eq.s32.totalorder %s14, 0
    %p203 = por %p201, %p202
    %p204 = scmp.ne.s32.totalorder %s196, %s198
    %p205 = scmp.eq.s32.totalorder %s19, 55
    %p206 = por %p204, %p205
    %p207 = scmp.ne.s32.totalorder %s198, %s199
    %p208 = scmp.eq.s32.totalorder %s19, 0
    %p209 = por %p207, %p208
    %p210 = scmp.ne.s32.totalorder %s198, %s199
    %p211 = scmp.eq.s32.totalorder %s20, 55
    %p212 = por %p210, %p211
    %p214 = scmp.ne.s32.totalorder %s199, %s213
    %p215 = scmp.eq.s32.totalorder %s20, 0
    %p216 = por %p214, %p215
    %s217 = ssub.s32 %s21, %s33
    %p218 = scmp.eq.s32.totalorder %s217, 0
    %s220 = sadd.s32 %s219, 1
    %s221 = scalar_select %p218, %s219, %s220
    %p224 = pneg %p218
    %p225 = scmp.eq.s32.totalorder %s14, 55
    %p226 = por %p224, %p225
    %p227 = scmp.ne.s32.totalorder %s219, %s222
    %p228 = scmp.eq.s32.totalorder %s14, 0
    %p229 = por %p227, %p228
    %p230 = scmp.ne.s32.totalorder %s219, %s222
    %p231 = scmp.eq.s32.totalorder %s19, 55
    %p232 = por %p230, %p231
    %p233 = scmp.ne.s32.totalorder %s222, %s223
    %p234 = scmp.eq.s32.totalorder %s19, 0
    %p235 = por %p233, %p234
    %p236 = scmp.ne.s32.totalorder %s222, %s223
    %p237 = scmp.eq.s32.totalorder %s20, 55
    %p238 = por %p236, %p237
    %p240 = scmp.ne.s32.totalorder %s223, %s239
    %p241 = scmp.eq.s32.totalorder %s20, 0
    %p242 = por %p240, %p241
    %p243 = scmp.le.s32.totalorder 1, %s14
    %p244 = scmp.lt.s32.totalorder %s14, 57
    %p245 = pnand %p243, %p244
    %p246 = pneg %p245
    // Predicated region
    $region9: #{rednet30_forward.1} parent=5 // pred_check
      _
    $region10: #{rednet30_forward.1} parent=5 // pred_check_branch
      %248 = sbr.rel (%p245) target = $region12
    $region11: #{rednet30_forward.1} parent=5 // pred_region
      %s249 = ssub.s32 %s14, 1
      // Predicated region
      $region13: #{rednet30_forward.1} parent=11 // pred_check
        %p250 = pneg %p99
      $region14: #{rednet30_forward.1} parent=11 // pred_check_branch
        %252 = sbr.rel (%p250) target = $region16
      $region15: #{rednet30_forward.1} parent=11 // pred_region
        _
      $region16: #{rednet30_forward.1} parent=11 // pred_fallthru
        _
      // Predicated region
      $region17: #{rednet30_forward.1} parent=11 // pred_check
        %p253 = pneg %p120
      $region18: #{rednet30_forward.1} parent=11 // pred_check_branch
        %255 = sbr.rel (%p253) target = $region20
      $region19: #{rednet30_forward.1} parent=11 // pred_region
        _
      $region20: #{rednet30_forward.1} parent=11 // pred_fallthru
        _
      // Predicated region
      $region21: #{rednet30_forward.1} parent=11 // pred_check
        %p256 = pneg %p167
      $region22: #{rednet30_forward.1} parent=11 // pred_check_branch
        %258 = sbr.rel (%p256) target = $region24
      $region23: #{rednet30_forward.1} parent=11 // pred_region
        _
      $region24: #{rednet30_forward.1} parent=11 // pred_fallthru
        _
      // Predicated region
      $region25: #{rednet30_forward.1} parent=11 // pred_check
        %p259 = pneg %p188
      $region26: #{rednet30_forward.1} parent=11 // pred_check_branch
        %261 = sbr.rel (%p259) target = $region28
      $region27: #{rednet30_forward.1} parent=11 // pred_region
        _
      $region28: #{rednet30_forward.1} parent=11 // pred_fallthru
        _
      // Predicated region
      $region29: #{rednet30_forward.1} parent=11 // pred_check
        %p262 = pneg %p209
      $region30: #{rednet30_forward.1} parent=11 // pred_check_branch
        %264 = sbr.rel (%p262) target = $region32
      $region31: #{rednet30_forward.1} parent=11 // pred_region
        _
      $region32: #{rednet30_forward.1} parent=11 // pred_fallthru
        _
    $region12: #{rednet30_forward.1} parent=5 // pred_fallthru
      _
    %p265 = scmp.lt.s32.totalorder %s14, 56
    // Predicated region
    $region33: #{rednet30_forward.1} parent=5 // pred_check
      %p266 = pneg %p265
    $region34: #{rednet30_forward.1} parent=5 // pred_check_branch
      %268 = sbr.rel (%p266) target = $region36
    $region35: #{rednet30_forward.1} parent=5 // pred_region
      // Predicated region
      $region37: #{rednet30_forward.1} parent=35 // pred_check
        %p269 = pneg %p46
      $region38: #{rednet30_forward.1} parent=35 // pred_check_branch
        %271 = sbr.rel (%p269) target = $region40
      $region39: #{rednet30_forward.1} parent=35 // pred_region
        %p272 = scmp.lt.s32.totalorder %s21, 1
        %s273 = scalar_select %p272, %s21, 1
        %s274 = smul.addr %s273, 8
        %s275 = smul.addr %s274, 8
        %s276 = scalar_lea.vmem %s0, %s275
      $region40: #{rednet30_forward.1} parent=35 // pred_fallthru
        _
      // Predicated region
      $region41: #{rednet30_forward.1} parent=35 // pred_check
        %p277 = pneg %p72
      $region42: #{rednet30_forward.1} parent=35 // pred_check_branch
        %279 = sbr.rel (%p277) target = $region44
      $region43: #{rednet30_forward.1} parent=35 // pred_region
        %p280 = scmp.lt.s32.totalorder %s21, 1
        %s281 = scalar_select %p280, %s21, 1
        %s282 = smul.addr %s281, 8
        %s283 = smul.addr %s282, 8
        %s284 = scalar_lea.vmem %s1, %s283
      $region44: #{rednet30_forward.1} parent=35 // pred_fallthru
        _
      // Predicated region
      $region45: #{rednet30_forward.1} parent=35 // pred_check
        %p285 = pneg %p140
      $region46: #{rednet30_forward.1} parent=35 // pred_check_branch
        %287 = sbr.rel (%p285) target = $region48
      $region47: #{rednet30_forward.1} parent=35 // pred_region
        %p288 = scmp.lt.s32.totalorder %s22, 27
        %s289 = scalar_select %p288, %s22, 27
        %s290 = smul.addr %s289, 72
        %s291 = smul.addr %s290, 4
        %s292 = scalar_lea.vmem %s4, %s291
      $region48: #{rednet30_forward.1} parent=35 // pred_fallthru
        _
    $region36: #{rednet30_forward.1} parent=5 // pred_fallthru
      _
    %p293 = scmp.le.s32.totalorder 1, %s14
    %p294 = scmp.lt.s32.totalorder %s14, 57
    %p295 = pnand %p293, %p294
    %p296 = pneg %p295
    // Predicated region
    $region49: #{rednet30_forward.1} parent=5 // pred_check
      _
    $region50: #{rednet30_forward.1} parent=5 // pred_check_branch
      %298 = sbr.rel (%p295) target = $region52
    $region51: #{rednet30_forward.1} parent=5 // pred_region
      %s299 = ssub.s32 %s14, 1
      %p300 = scmp.lt.s32.totalorder %s23, 1
      %s301 = scalar_select %p300, %s23, 1
      %s302 = smul.addr %s301, 8
      %s303 = smul.addr %s302, 8
      %s304 = scalar_lea.vmem %s0, %s303
      %p305 = pneg %p52
      %p306 = pneg %p49
      %p307 = scmp.lt.s32.totalorder %s23, 1
      %s308 = scalar_select %p307, %s23, 1
      %s309 = smul.addr %s308, 8
      %s310 = smul.addr %s309, 8
      %s311 = scalar_lea.vmem %s1, %s310
      %p312 = pneg %p78
      %p313 = pneg %p75
      %p314 = pneg %p99
      %p315 = pneg %p96
      %p316 = pneg %p120
      %p317 = pneg %p117
      %p318 = scmp.lt.s32.totalorder %s24, 27
      %s319 = scalar_select %p318, %s24, 27
      %s320 = smul.addr %s319, 72
      %s321 = smul.addr %s320, 4
      %s322 = scalar_lea.vmem %s4, %s321
      %p323 = pneg %p146
      %p324 = pneg %p143
      %p325 = pneg %p167
      %p326 = pneg %p164
      %p327 = pneg %p188
      %p328 = pneg %p185
      %p329 = pneg %p209
      %p330 = pneg %p206
      %p331 = pneg %p235
      %p332 = pneg %p232
      %p333 = scmp.lt.s32.totalorder %s23, 1
      %s334 = scalar_select %p333, %s23, 1
      %s335 = smul.addr %s334, 8
      %s336 = smul.addr %s335, 8
      %s337 = scalar_lea.vmem %s8, %s336
      %p338 = scmp.lt.s32.totalorder %s23, 1
      %s339 = scalar_select %p338, %s23, 1
      %s340 = smul.addr %s339, 8
      %s341 = smul.addr %s340, 8
      %s342 = scalar_lea.vmem %s0, %s341
      %p343 = scmp.lt.s32.totalorder %s23, 1
      %s344 = scalar_select %p343, %s23, 1
      %s345 = smul.addr %s344, 8
      %s346 = smul.addr %s345, 8
      %s347 = scalar_lea.vmem %s1, %s346
      %p348 = scmp.lt.s32.totalorder %s24, 27
      %s349 = scalar_select %p348, %s24, 27
      %s350 = smul.addr %s349, 72
      %s351 = smul.addr %s350, 4
      %s352 = scalar_lea.vmem %s4, %s351
      %p353 = scmp.lt.s32.totalorder %s23, 1
      %s354 = scalar_select %p353, %s23, 1
      %s355 = smul.addr %s354, 8
      %s356 = smul.addr %s355, 8
      %s357 = scalar_lea.vmem %s8, %s356
      %p359 = scmp.eq.s32.totalorder %s24, 0
      // Predicated region
      $region53: #{rednet30_forward.1} parent=51 // pred_check
        %p360 = pneg %p359
      $region54: #{rednet30_forward.1} parent=51 // pred_check_branch
        %362 = sbr.rel (%p360) target = $region56
      $region55: #{rednet30_forward.1} parent=51 // pred_region
        %vm363 = vcmask 519168
        %364 = vst.msk [vmem:[#allocation2] sm:$0xf] %vm363, 0
        %vm365 = vcmask 516096
        %366 = vst.msk [vmem:[#allocation2 + $0x4] sm:$0x1] %vm365, 0
        %367 = vst.msk [vmem:[#allocation2 + $0x8] sm:$0xf] %vm363, 0
        %368 = vst.msk [vmem:[#allocation2 + $0xc] sm:$0x1] %vm365, 0
        %369 = vst.msk [vmem:[#allocation2 + $0x10] sm:$0xf] %vm363, 0
        %370 = vst.msk [vmem:[#allocation2 + $0x14] sm:$0x1] %vm365, 0
        %371 = vst.msk [vmem:[#allocation2 + $0x18] sm:$0xf] %vm363, 0
        %372 = vst.msk [vmem:[#allocation2 + $0x1c] sm:$0x1] %vm365, 0
        %373 = vst.msk [vmem:[#allocation2 + $0x20] sm:$0xf] %vm363, 0
        %374 = vst.msk [vmem:[#allocation2 + $0x24] sm:$0x1] %vm365, 0
        %375 = vst.msk [vmem:[#allocation2 + $0x28] sm:$0xf] %vm363, 0
        %376 = vst.msk [vmem:[#allocation2 + $0x2c] sm:$0x1] %vm365, 0
        %377 = vst.msk [vmem:[#allocation2 + $0x30] sm:$0xf] %vm363, 0
        %378 = vst.msk [vmem:[#allocation2 + $0x34] sm:$0x1] %vm365, 0
        %379 = vst.msk [vmem:[#allocation2 + $0x38] sm:$0xf] %vm363, 0
        %380 = vst.msk [vmem:[#allocation2 + $0x3c] sm:$0x1] %vm365, 0
        %381 = vst.msk [vmem:[#allocation2 + $0x40] sm:$0xf] %vm363, 0
        %382 = vst.msk [vmem:[#allocation2 + $0x44] sm:$0x1] %vm365, 0
        %383 = vst.msk [vmem:[#allocation2 + $0x48] sm:$0xf] %vm363, 0
        %384 = vst.msk [vmem:[#allocation2 + $0x4c] sm:$0x1] %vm365, 0
        %v385 = vld [vmem:[%s342] sm:$0xff]
        %v386 = vld [vmem:[%s342 + $0x8] sm:$0xff]
        %v387 = vld [vmem:[%s342 + $0x10] sm:$0xff]
        %v388 = vld [vmem:[%s342 + $0x18] sm:$0xff]
        %v389 = vld [vmem:[%s342 + $0x20] sm:$0xff]
        %v390 = vld [vmem:[%s342 + $0x28] sm:$0xff]
        %v391 = vld [vmem:[%s342 + $0x30] sm:$0xff]
        %v392 = vld [vmem:[%s342 + $0x38] sm:$0xff]
        %v393 = vld [vmem:[%s2] sm:$0xff]
        %v394 = vld [vmem:[%s2 + $0x8] sm:$0x1]
        %v395 = vld [vmem:[%s3] sm:$0x1]
        %v397 = vlaneseq
        %v398 = vshrl.u32 %v397, 7
        %v399 = vsub.s32 0, %v398
        %v400 = vrot.slane %v395, %v399
        %vm402 = vcmask 72704
        %v404 = vsel %vm402, %v385, 0
        %v407 = vsel %vm402, %v386, 0
        %v410 = vsel %vm402, %v387, 0
        %v413 = vsel %vm402, %v388, 0
        %v416 = vsel %vm402, %v389, 0
        %v419 = vsel %vm402, %v390, 0
        %v422 = vsel %vm402, %v391, 0
        %v425 = vsel %vm402, %v392, 0
        %vm427 = vcmask 1040384
        %v429 = vsel %vm427, %v394, 0
        %431 = vmatprep.subr.mxu0 0.0
        %432 = vmatpush1.msra.mxu0 0.0
        %433 = vmatprep.subr.mxu0 0.0
        %434 = vmatpush1.msra.mxu0 0.0
        %435 = vmatprep.subr.mxu0 0.0
        %436 = vmatpush1.msra.mxu0 0.0
        %437 = vmatprep.subr.mxu0 0.0
        %438 = vmatpush1.msra.mxu0 0.0
        %439 = vmatprep.subr.mxu0 0.0
        %440 = vmatpush1.msra.mxu0 0.0
        %441 = vmatprep.subr.mxu0 0.0
        %442 = vmatpush1.msra.mxu0 0.0
        %443 = vmatprep.subr.mxu0 0.0
        %444 = vmatpush1.msra.mxu0 0.0
        %445 = vmatprep.subr.mxu0 0.0
        %446 = vmatpush1.msra.mxu0 0.0
        %447 = vmatprep.subr.mxu0 0.0
        %448 = vmatpush1.msra.mxu0 0.0
        %449 = vmatprep.subr.mxu0 0.0
        %450 = vmatpush1.msra.mxu0 0.0
        %451 = vmatprep.subr.mxu0 0.0
        %452 = vmatpush1.msra.mxu0 0.0
        %453 = vmatprep.subr.mxu0 0.0
        %454 = vmatpush1.msra.mxu0 0.0
        %455 = vmatprep.subr.mxu0 0.0
        %456 = vmatpush1.msra.mxu0 0.0
        %457 = vmatprep.subr.mxu0 0.0
        %458 = vmatpush1.msra.mxu0 0.0
        %459 = vmatprep.subr.mxu0 0.0
        %460 = vmatpush1.msra.mxu0 %v429
        %461 = vmatprep.subr.mxu0 0.0
        %462 = vmatpush1.msra.mxu0 %v393
        %463 = vmatprep.subr.mxu0 0.0
        %464 = vmatpush2.msra.mxu0 0.0
        %465 = vmatprep.subr.mxu0 0.0
        %466 = vmatpush2.msra.mxu0 0.0
        %467 = vmatprep.subr.mxu0 0.0
        %468 = vmatpush2.msra.mxu0 0.0
        %469 = vmatprep.subr.mxu0 0.0
        %470 = vmatpush2.msra.mxu0 0.0
        %471 = vmatprep.subr.mxu0 0.0
        %472 = vmatpush2.msra.mxu0 0.0
        %473 = vmatprep.subr.mxu0 0.0
        %474 = vmatpush2.msra.mxu0 0.0
        %475 = vmatprep.subr.mxu0 0.0
        %476 = vmatpush2.msra.mxu0 0.0
        %477 = vmatprep.subr.mxu0 0.0
        %478 = vmatpush2.msra.mxu0 0.0
        %479 = vmatprep.subr.mxu0 0.0
        %480 = vmatpush2.msra.mxu0 0.0
        %481 = vmatprep.subr.mxu0 0.0
        %482 = vmatpush2.msra.mxu0 0.0
        %483 = vmatprep.subr.mxu0 0.0
        %484 = vmatpush2.msra.mxu0 0.0
        %485 = vmatprep.subr.mxu0 0.0
        %486 = vmatpush2.msra.mxu0 0.0
        %487 = vmatprep.subr.mxu0 0.0
        %488 = vmatpush2.msra.mxu0 0.0
        %489 = vmatprep.subr.mxu0 0.0
        %490 = vmatpush2.msra.mxu0 0.0
        %491 = vmatprep.subr.mxu0 0.0
        %492 = vmatpush2.msra.mxu0 0.0
        %493 = vmatprep.subr.mxu0 0.0
        %494 = vmatpush2.msra.mxu0 0.0
        %495 = vmatprep.mubr.f32.mxu0 0.0
        %496 = vmatmul.mubr.f32.gmra.mxu0 %v404
        %v497 = vpop.f32.mrf.mxu0
        %v498 = vadd.f32 %v400, %v497
        %v499 = vpop.f32.mrf.mxu0
        %500 = vmatprep.mubr.f32.mxu0 0.0
        %501 = vmatmul.mubr.f32.gmra.mxu0 %v407
        %v502 = vpop.f32.mrf.mxu0
        %v503 = vadd.f32 %v400, %v502
        %v504 = vpop.f32.mrf.mxu0
        %505 = vmatprep.mubr.f32.mxu0 0.0
        %506 = vmatmul.mubr.f32.gmra.mxu0 %v410
        %v507 = vpop.f32.mrf.mxu0
        %v508 = vadd.f32 %v400, %v507
        %v509 = vpop.f32.mrf.mxu0
        %510 = vmatprep.mubr.f32.mxu0 0.0
        %511 = vmatmul.mubr.f32.gmra.mxu0 %v413
        %v512 = vpop.f32.mrf.mxu0
        %v513 = vadd.f32 %v400, %v512
        %v514 = vpop.f32.mrf.mxu0
        %515 = vmatprep.mubr.f32.mxu0 0.0
        %516 = vmatmul.mubr.f32.gmra.mxu0 %v416
        %v517 = vpop.f32.mrf.mxu0
        %v518 = vadd.f32 %v400, %v517
        %v519 = vpop.f32.mrf.mxu0
        %520 = vmatprep.mubr.f32.mxu0 0.0
        %521 = vmatmul.mubr.f32.gmra.mxu0 %v419
        %v522 = vpop.f32.mrf.mxu0
        %v523 = vadd.f32 %v400, %v522
        %v524 = vpop.f32.mrf.mxu0
        %525 = vmatprep.mubr.f32.mxu0 0.0
        %526 = vmatmul.mubr.f32.gmra.mxu0 %v422
        %v527 = vpop.f32.mrf.mxu0
        %v528 = vadd.f32 %v400, %v527
        %v529 = vpop.f32.mrf.mxu0
        %530 = vmatprep.mubr.f32.mxu0 0.0
        %531 = vmatmul.mubr.f32.gmra.mxu0 %v425
        %v532 = vpop.f32.mrf.mxu0
        %v533 = vadd.f32 %v400, %v532
        %v534 = vpop.f32.mrf.mxu0
        %535 = vdwg.mxu0
        %v536 = vmax.f32 %v498, 0.0
        %v537 = vmax.f32 %v503, 0.0
        %v538 = vmax.f32 %v508, 0.0
        %v539 = vmax.f32 %v513, 0.0
        %v540 = vmax.f32 %v518, 0.0
        %v541 = vmax.f32 %v523, 0.0
        %v542 = vmax.f32 %v528, 0.0
        %v543 = vmax.f32 %v533, 0.0
        %v544 = vpack.c.bf16 %v536, %v536
        %v545 = vpack.c.bf16 %v537, %v537
        %v546 = vpack.c.bf16 %v538, %v538
        %v547 = vpack.c.bf16 %v539, %v539
        %v548 = vpack.c.bf16 %v540, %v540
        %v549 = vpack.c.bf16 %v541, %v541
        %v550 = vpack.c.bf16 %v542, %v542
        %v551 = vpack.c.bf16 %v543, %v543
        %v560 = vunpack.c.l.b16 %v544
        %v561 = vunpack.c.l.b16 %v545
        %v562 = vunpack.c.l.b16 %v546
        %v563 = vunpack.c.l.b16 %v547
        %v564 = vunpack.c.l.b16 %v548
        %v565 = vunpack.c.l.b16 %v549
        %v566 = vunpack.c.l.b16 %v550
        %v567 = vunpack.c.l.b16 %v551
        %v568 = vpack.c.b16 %v560, %v560
        %v569 = vpack.c.b16 %v561, %v561
        %v570 = vpack.c.b16 %v562, %v562
        %v571 = vpack.c.b16 %v563, %v563
        %v572 = vpack.c.b16 %v564, %v564
        %v573 = vpack.c.b16 %v565, %v565
        %v574 = vpack.c.b16 %v566, %v566
        %v575 = vpack.c.b16 %v567, %v567
        %v577 = vshrl.u32 %v568, 16
        %v579 = vrot.slane %v577, 7
        %v580 = vshll.u32 %v568, 16
        %v582 = vor.u32 %v579, %v580
        %v583 = vrot.slane %v579, 4
        %v585 = vshrl.u32 %v569, 16
        %v587 = vrot.slane %v585, 7
        %v588 = vshll.u32 %v569, 16
        %v590 = vor.u32 %v587, %v588
        %v591 = vrot.slane %v587, 4
        %v593 = vshrl.u32 %v570, 16
        %v595 = vrot.slane %v593, 7
        %v596 = vshll.u32 %v570, 16
        %v598 = vor.u32 %v595, %v596
        %v599 = vrot.slane %v595, 4
        %v601 = vshrl.u32 %v571, 16
        %v603 = vrot.slane %v601, 7
        %v604 = vshll.u32 %v571, 16
        %v606 = vor.u32 %v603, %v604
        %v607 = vrot.slane %v603, 4
        %v609 = vshrl.u32 %v572, 16
        %v611 = vrot.slane %v609, 7
        %v612 = vshll.u32 %v572, 16
        %v614 = vor.u32 %v611, %v612
        %v615 = vrot.slane %v611, 4
        %v617 = vshrl.u32 %v573, 16
        %v619 = vrot.slane %v617, 7
        %v620 = vshll.u32 %v573, 16
        %v622 = vor.u32 %v619, %v620
        %v623 = vrot.slane %v619, 4
        %v625 = vshrl.u32 %v574, 16
        %v627 = vrot.slane %v625, 7
        %v628 = vshll.u32 %v574, 16
        %v630 = vor.u32 %v627, %v628
        %v631 = vrot.slane %v627, 4
        %v633 = vshrl.u32 %v575, 16
        %v635 = vrot.slane %v633, 7
        %v636 = vshll.u32 %v575, 16
        %v638 = vor.u32 %v635, %v636
        %v639 = vrot.slane %v635, 4
        %s656 = scalar_lea.vmem [#allocation2], 8
        %vm657 = vcmask 519168
        %vm658 = vsmask.f32 7938
        %vm659 = vmand %vm657, %vm658
        %v660 = vld [vmem:[%s656] sm:$0xf]
        %v661 = vsel %vm659, %v582, %v660
        %662 = vst [vmem:[%s656] sm:$0xf] %v661
        %vm663 = vcmask 516096
        %vm664 = vsmask.f32 256
        %vm665 = vmand %vm663, %vm664
        %v666 = vld [vmem:[%s656 + $0x4] sm:$0x1]
        %v667 = vsel %vm665, %v583, %v666
        %668 = vst [vmem:[%s656 + $0x4] sm:$0x1] %v667
        %v669 = vld [vmem:[%s656 + $0x8] sm:$0xf]
        %v670 = vsel %vm659, %v590, %v669
        %671 = vst [vmem:[%s656 + $0x8] sm:$0xf] %v670
        %v672 = vld [vmem:[%s656 + $0xc] sm:$0x1]
        %v673 = vsel %vm665, %v591, %v672
        %674 = vst [vmem:[%s656 + $0xc] sm:$0x1] %v673
        %v675 = vld [vmem:[%s656 + $0x10] sm:$0xf]
        %v676 = vsel %vm659, %v598, %v675
        %677 = vst [vmem:[%s656 + $0x10] sm:$0xf] %v676
        %v678 = vld [vmem:[%s656 + $0x14] sm:$0x1]
        %v679 = vsel %vm665, %v599, %v678
        %680 = vst [vmem:[%s656 + $0x14] sm:$0x1] %v679
        %v681 = vld [vmem:[%s656 + $0x18] sm:$0xf]
        %v682 = vsel %vm659, %v606, %v681
        %683 = vst [vmem:[%s656 + $0x18] sm:$0xf] %v682
        %v684 = vld [vmem:[%s656 + $0x1c] sm:$0x1]
        %v685 = vsel %vm665, %v607, %v684
        %686 = vst [vmem:[%s656 + $0x1c] sm:$0x1] %v685
        %v687 = vld [vmem:[%s656 + $0x20] sm:$0xf]
        %v688 = vsel %vm659, %v614, %v687
        %689 = vst [vmem:[%s656 + $0x20] sm:$0xf] %v688
        %v690 = vld [vmem:[%s656 + $0x24] sm:$0x1]
        %v691 = vsel %vm665, %v615, %v690
        %692 = vst [vmem:[%s656 + $0x24] sm:$0x1] %v691
        %v693 = vld [vmem:[%s656 + $0x28] sm:$0xf]
        %v694 = vsel %vm659, %v622, %v693
        %695 = vst [vmem:[%s656 + $0x28] sm:$0xf] %v694
        %v696 = vld [vmem:[%s656 + $0x2c] sm:$0x1]
        %v697 = vsel %vm665, %v623, %v696
        %698 = vst [vmem:[%s656 + $0x2c] sm:$0x1] %v697
        %v699 = vld [vmem:[%s656 + $0x30] sm:$0xf]
        %v700 = vsel %vm659, %v630, %v699
        %701 = vst [vmem:[%s656 + $0x30] sm:$0xf] %v700
        %v702 = vld [vmem:[%s656 + $0x34] sm:$0x1]
        %v703 = vsel %vm665, %v631, %v702
        %704 = vst [vmem:[%s656 + $0x34] sm:$0x1] %v703
        %v705 = vld [vmem:[%s656 + $0x38] sm:$0xf]
        %v706 = vsel %vm659, %v638, %v705
        %707 = vst [vmem:[%s656 + $0x38] sm:$0xf] %v706
        %v708 = vld [vmem:[%s656 + $0x3c] sm:$0x1]
        %v709 = vsel %vm665, %v639, %v708
        %710 = vst [vmem:[%s656 + $0x3c] sm:$0x1] %v709
      $region56: #{rednet30_forward.1} parent=51 // pred_fallthru
        _
      %v711 = vld [vmem:[#allocation2] sm:$0xf]
      %v712 = vld [vmem:[#allocation2 + $0x8] sm:$0xf]
      %v713 = vld [vmem:[#allocation2 + $0x10] sm:$0xf]
      %v714 = vld [vmem:[#allocation2 + $0x18] sm:$0xf]
      %v715 = vld [vmem:[#allocation2 + $0x20] sm:$0xf]
      %v716 = vld [vmem:[#allocation2 + $0x28] sm:$0xf]
      %v717 = vld [vmem:[#allocation2 + $0x30] sm:$0xf]
      %v718 = vld [vmem:[#allocation2 + $0x38] sm:$0xf]
      %v719 = vld [vmem:[#allocation2 + $0x4] sm:$0x1]
      %v720 = vld [vmem:[#allocation2 + $0xc] sm:$0x1]
      %v721 = vld [vmem:[#allocation2 + $0x14] sm:$0x1]
      %v722 = vld [vmem:[#allocation2 + $0x1c] sm:$0x1]
      %v723 = vld [vmem:[#allocation2 + $0x24] sm:$0x1]
      %v724 = vld [vmem:[#allocation2 + $0x2c] sm:$0x1]
      %v725 = vld [vmem:[#allocation2 + $0x34] sm:$0x1]
      %v726 = vld [vmem:[#allocation2 + $0x3c] sm:$0x1]
      %vm727 = vsmask.f32 3328
      %vm728 = vsmask.f32 7440
      %vm729 = vmor %vm727, %vm728
      %v731 = vshrl.u32 %v711, 16
      %v733 = vrot.slane %v731, 4
      %v734 = vshll.u32 %v711, 16
      %v736 = vrot.slane %v734, 5
      %v737 = vor.u32 %v733, %v736
      %v738 = vrot.slane %v737, 4
      %v740 = vshll.u32 %v719, 16
      %v742 = vrot.slane %v740, 5
      %v743 = vsel %vm729, %v738, %v742
      %v745 = vshrl.u32 %v712, 16
      %v747 = vrot.slane %v745, 4
      %v748 = vshll.u32 %v712, 16
      %v750 = vrot.slane %v748, 5
      %v751 = vor.u32 %v747, %v750
      %v752 = vrot.slane %v751, 4
      %v754 = vshll.u32 %v720, 16
      %v756 = vrot.slane %v754, 5
      %v757 = vsel %vm729, %v752, %v756
      %v759 = vshrl.u32 %v713, 16
      %v761 = vrot.slane %v759, 4
      %v762 = vshll.u32 %v713, 16
      %v764 = vrot.slane %v762, 5
      %v765 = vor.u32 %v761, %v764
      %v766 = vrot.slane %v765, 4
      %v768 = vshll.u32 %v721, 16
      %v770 = vrot.slane %v768, 5
      %v771 = vsel %vm729, %v766, %v770
      %v773 = vshrl.u32 %v714, 16
      %v775 = vrot.slane %v773, 4
      %v776 = vshll.u32 %v714, 16
      %v778 = vrot.slane %v776, 5
      %v779 = vor.u32 %v775, %v778
      %v780 = vrot.slane %v779, 4
      %v782 = vshll.u32 %v722, 16
      %v784 = vrot.slane %v782, 5
      %v785 = vsel %vm729, %v780, %v784
      %v787 = vshrl.u32 %v715, 16
      %v789 = vrot.slane %v787, 4
      %v790 = vshll.u32 %v715, 16
      %v792 = vrot.slane %v790, 5
      %v793 = vor.u32 %v789, %v792
      %v794 = vrot.slane %v793, 4
      %v796 = vshll.u32 %v723, 16
      %v798 = vrot.slane %v796, 5
      %v799 = vsel %vm729, %v794, %v798
      %v801 = vshrl.u32 %v716, 16
      %v803 = vrot.slane %v801, 4
      %v804 = vshll.u32 %v716, 16
      %v806 = vrot.slane %v804, 5
      %v807 = vor.u32 %v803, %v806
      %v808 = vrot.slane %v807, 4
      %v810 = vshll.u32 %v724, 16
      %v812 = vrot.slane %v810, 5
      %v813 = vsel %vm729, %v808, %v812
      %v815 = vshrl.u32 %v717, 16
      %v817 = vrot.slane %v815, 4
      %v818 = vshll.u32 %v717, 16
      %v820 = vrot.slane %v818, 5
      %v821 = vor.u32 %v817, %v820
      %v822 = vrot.slane %v821, 4
      %v824 = vshll.u32 %v725, 16
      %v826 = vrot.slane %v824, 5
      %v827 = vsel %vm729, %v822, %v826
      %v829 = vshrl.u32 %v718, 16
      %v831 = vrot.slane %v829, 4
      %v832 = vshll.u32 %v718, 16
      %v834 = vrot.slane %v832, 5
      %v835 = vor.u32 %v831, %v834
      %v836 = vrot.slane %v835, 4
      %v838 = vshll.u32 %v726, 16
      %v840 = vrot.slane %v838, 5
      %v841 = vsel %vm729, %v836, %v840
      %v842 = vld [vmem:[#allocation2] sm:$0xe]
      %v843 = vld [vmem:[#allocation2 + $0x8] sm:$0xe]
      %v844 = vld [vmem:[#allocation2 + $0x10] sm:$0xe]
      %v845 = vld [vmem:[#allocation2 + $0x18] sm:$0xe]
      %v846 = vld [vmem:[#allocation2 + $0x20] sm:$0xe]
      %v847 = vld [vmem:[#allocation2 + $0x28] sm:$0xe]
      %v848 = vld [vmem:[#allocation2 + $0x30] sm:$0xe]
      %v849 = vld [vmem:[#allocation2 + $0x38] sm:$0xe]
      %vm866 = vcmask 1042432
      %vm867 = vcmask 1046532
      %vm868 = vmor %vm866, %vm867
      %v869 = vrot.slane %v842, 5
      %v870 = vrot.slane %v869, 4
      %v871 = vrot.slane %v719, 5
      %v872 = vsel %vm868, %v870, %v871
      %v873 = vrot.slane %v843, 5
      %v874 = vrot.slane %v873, 4
      %v875 = vrot.slane %v720, 5
      %v876 = vsel %vm868, %v874, %v875
      %v877 = vrot.slane %v844, 5
      %v878 = vrot.slane %v877, 4
      %v879 = vrot.slane %v721, 5
      %v880 = vsel %vm868, %v878, %v879
      %v881 = vrot.slane %v845, 5
      %v882 = vrot.slane %v881, 4
      %v883 = vrot.slane %v722, 5
      %v884 = vsel %vm868, %v882, %v883
      %v885 = vrot.slane %v846, 5
      %v886 = vrot.slane %v885, 4
      %v887 = vrot.slane %v723, 5
      %v888 = vsel %vm868, %v886, %v887
      %v889 = vrot.slane %v847, 5
      %v890 = vrot.slane %v889, 4
      %v891 = vrot.slane %v724, 5
      %v892 = vsel %vm868, %v890, %v891
      %v893 = vrot.slane %v848, 5
      %v894 = vrot.slane %v893, 4
      %v895 = vrot.slane %v725, 5
      %v896 = vsel %vm868, %v894, %v895
      %v897 = vrot.slane %v849, 5
      %v898 = vrot.slane %v897, 4
      %v899 = vrot.slane %v726, 5
      %v900 = vsel %vm868, %v898, %v899
      %s901 = scalar_lea.vmem [#allocation2], 8
      %v902 = vld [vmem:[%s901] sm:$0xf]
      %v903 = vld [vmem:[%s901 + $0x8] sm:$0xf]
      %v904 = vld [vmem:[%s901 + $0x10] sm:$0xf]
      %v905 = vld [vmem:[%s901 + $0x18] sm:$0xf]
      %v906 = vld [vmem:[%s901 + $0x20] sm:$0xf]
      %v907 = vld [vmem:[%s901 + $0x28] sm:$0xf]
      %v908 = vld [vmem:[%s901 + $0x30] sm:$0xf]
      %v909 = vld [vmem:[%s901 + $0x38] sm:$0xf]
      %v910 = vld [vmem:[%s901 + $0x4] sm:$0x1]
      %v911 = vld [vmem:[%s901 + $0xc] sm:$0x1]
      %v912 = vld [vmem:[%s901 + $0x14] sm:$0x1]
      %v913 = vld [vmem:[%s901 + $0x1c] sm:$0x1]
      %v914 = vld [vmem:[%s901 + $0x24] sm:$0x1]
      %v915 = vld [vmem:[%s901 + $0x2c] sm:$0x1]
      %v916 = vld [vmem:[%s901 + $0x34] sm:$0x1]
      %v917 = vld [vmem:[%s901 + $0x3c] sm:$0x1]
      %v919 = vshrl.u32 %v902, 16
      %v921 = vrot.slane %v919, 4
      %v922 = vshll.u32 %v902, 16
      %v924 = vrot.slane %v922, 5
      %v925 = vor.u32 %v921, %v924
      %v926 = vrot.slane %v925, 4
      %v928 = vshll.u32 %v910, 16
      %v930 = vrot.slane %v928, 5
      %v931 = vsel %vm729, %v926, %v930
      %v933 = vshrl.u32 %v903, 16
      %v935 = vrot.slane %v933, 4
      %v936 = vshll.u32 %v903, 16
      %v938 = vrot.slane %v936, 5
      %v939 = vor.u32 %v935, %v938
      %v940 = vrot.slane %v939, 4
      %v942 = vshll.u32 %v911, 16
      %v944 = vrot.slane %v942, 5
      %v945 = vsel %vm729, %v940, %v944
      %v947 = vshrl.u32 %v904, 16
      %v949 = vrot.slane %v947, 4
      %v950 = vshll.u32 %v904, 16
      %v952 = vrot.slane %v950, 5
      %v953 = vor.u32 %v949, %v952
      %v954 = vrot.slane %v953, 4
      %v956 = vshll.u32 %v912, 16
      %v958 = vrot.slane %v956, 5
      %v959 = vsel %vm729, %v954, %v958
      %v961 = vshrl.u32 %v905, 16
      %v963 = vrot.slane %v961, 4
      %v964 = vshll.u32 %v905, 16
      %v966 = vrot.slane %v964, 5
      %v967 = vor.u32 %v963, %v966
      %v968 = vrot.slane %v967, 4
      %v970 = vshll.u32 %v913, 16
      %v972 = vrot.slane %v970, 5
      %v973 = vsel %vm729, %v968, %v972
      %v975 = vshrl.u32 %v906, 16
      %v977 = vrot.slane %v975, 4
      %v978 = vshll.u32 %v906, 16
      %v980 = vrot.slane %v978, 5
      %v981 = vor.u32 %v977, %v980
      %v982 = vrot.slane %v981, 4
      %v984 = vshll.u32 %v914, 16
      %v986 = vrot.slane %v984, 5
      %v987 = vsel %vm729, %v982, %v986
      %v989 = vshrl.u32 %v907, 16
      %v991 = vrot.slane %v989, 4
      %v992 = vshll.u32 %v907, 16
      %v994 = vrot.slane %v992, 5
      %v995 = vor.u32 %v991, %v994
      %v996 = vrot.slane %v995, 4
      %v998 = vshll.u32 %v915, 16
      %v1000 = vrot.slane %v998, 5
      %v1001 = vsel %vm729, %v996, %v1000
      %v1003 = vshrl.u32 %v908, 16
      %v1005 = vrot.slane %v1003, 4
      %v1006 = vshll.u32 %v908, 16
      %v1008 = vrot.slane %v1006, 5
      %v1009 = vor.u32 %v1005, %v1008
      %v1010 = vrot.slane %v1009, 4
      %v1012 = vshll.u32 %v916, 16
      %v1014 = vrot.slane %v1012, 5
      %v1015 = vsel %vm729, %v1010, %v1014
      %v1017 = vshrl.u32 %v909, 16
      %v1019 = vrot.slane %v1017, 4
      %v1020 = vshll.u32 %v909, 16
      %v1022 = vrot.slane %v1020, 5
      %v1023 = vor.u32 %v1019, %v1022
      %v1024 = vrot.slane %v1023, 4
      %v1026 = vshll.u32 %v917, 16
      %v1028 = vrot.slane %v1026, 5
      %v1029 = vsel %vm729, %v1024, %v1028
      %v1030 = vld [vmem:[%s901] sm:$0xe]
      %v1031 = vld [vmem:[%s901 + $0x8] sm:$0xe]
      %v1032 = vld [vmem:[%s901 + $0x10] sm:$0xe]
      %v1033 = vld [vmem:[%s901 + $0x18] sm:$0xe]
      %v1034 = vld [vmem:[%s901 + $0x20] sm:$0xe]
      %v1035 = vld [vmem:[%s901 + $0x28] sm:$0xe]
      %v1036 = vld [vmem:[%s901 + $0x30] sm:$0xe]
      %v1037 = vld [vmem:[%s901 + $0x38] sm:$0xe]
      %v1054 = vrot.slane %v1030, 5
      %v1055 = vrot.slane %v1054, 4
      %v1056 = vrot.slane %v910, 5
      %v1057 = vsel %vm868, %v1055, %v1056
      %v1058 = vrot.slane %v1031, 5
      %v1059 = vrot.slane %v1058, 4
      %v1060 = vrot.slane %v911, 5
      %v1061 = vsel %vm868, %v1059, %v1060
      %v1062 = vrot.slane %v1032, 5
      %v1063 = vrot.slane %v1062, 4
      %v1064 = vrot.slane %v912, 5
      %v1065 = vsel %vm868, %v1063, %v1064
      %v1066 = vrot.slane %v1033, 5
      %v1067 = vrot.slane %v1066, 4
      %v1068 = vrot.slane %v913, 5
      %v1069 = vsel %vm868, %v1067, %v1068
      %v1070 = vrot.slane %v1034, 5
      %v1071 = vrot.slane %v1070, 4
      %v1072 = vrot.slane %v914, 5
      %v1073 = vsel %vm868, %v1071, %v1072
      %v1074 = vrot.slane %v1035, 5
      %v1075 = vrot.slane %v1074, 4
      %v1076 = vrot.slane %v915, 5
      %v1077 = vsel %vm868, %v1075, %v1076
      %v1078 = vrot.slane %v1036, 5
      %v1079 = vrot.slane %v1078, 4
      %v1080 = vrot.slane %v916, 5
      %v1081 = vsel %vm868, %v1079, %v1080
      %v1082 = vrot.slane %v1037, 5
      %v1083 = vrot.slane %v1082, 4
      %v1084 = vrot.slane %v917, 5
      %v1085 = vsel %vm868, %v1083, %v1084
      %s1086 = scalar_lea.vmem [#allocation2], 16
      %v1087 = vld [vmem:[%s1086] sm:$0xf]
      %v1088 = vld [vmem:[%s1086 + $0x8] sm:$0xf]
      %v1089 = vld [vmem:[%s1086 + $0x10] sm:$0xf]
      %v1090 = vld [vmem:[%s1086 + $0x18] sm:$0xf]
      %v1091 = vld [vmem:[%s1086 + $0x20] sm:$0xf]
      %v1092 = vld [vmem:[%s1086 + $0x28] sm:$0xf]
      %v1093 = vld [vmem:[%s1086 + $0x30] sm:$0xf]
      %v1094 = vld [vmem:[%s1086 + $0x38] sm:$0xf]
      %v1095 = vld [vmem:[%s1086 + $0x4] sm:$0x1]
      %v1096 = vld [vmem:[%s1086 + $0xc] sm:$0x1]
      %v1097 = vld [vmem:[%s1086 + $0x14] sm:$0x1]
      %v1098 = vld [vmem:[%s1086 + $0x1c] sm:$0x1]
      %v1099 = vld [vmem:[%s1086 + $0x24] sm:$0x1]
      %v1100 = vld [vmem:[%s1086 + $0x2c] sm:$0x1]
      %v1101 = vld [vmem:[%s1086 + $0x34] sm:$0x1]
      %v1102 = vld [vmem:[%s1086 + $0x3c] sm:$0x1]
      %v1104 = vshrl.u32 %v1087, 16
      %v1106 = vrot.slane %v1104, 4
      %v1107 = vshll.u32 %v1087, 16
      %v1109 = vrot.slane %v1107, 5
      %v1110 = vor.u32 %v1106, %v1109
      %v1111 = vrot.slane %v1110, 4
      %v1113 = vshll.u32 %v1095, 16
      %v1115 = vrot.slane %v1113, 5
      %v1116 = vsel %vm729, %v1111, %v1115
      %v1118 = vshrl.u32 %v1088, 16
      %v1120 = vrot.slane %v1118, 4
      %v1121 = vshll.u32 %v1088, 16
      %v1123 = vrot.slane %v1121, 5
      %v1124 = vor.u32 %v1120, %v1123
      %v1125 = vrot.slane %v1124, 4
      %v1127 = vshll.u32 %v1096, 16
      %v1129 = vrot.slane %v1127, 5
      %v1130 = vsel %vm729, %v1125, %v1129
      %v1132 = vshrl.u32 %v1089, 16
      %v1134 = vrot.slane %v1132, 4
      %v1135 = vshll.u32 %v1089, 16
      %v1137 = vrot.slane %v1135, 5
      %v1138 = vor.u32 %v1134, %v1137
      %v1139 = vrot.slane %v1138, 4
      %v1141 = vshll.u32 %v1097, 16
      %v1143 = vrot.slane %v1141, 5
      %v1144 = vsel %vm729, %v1139, %v1143
      %v1146 = vshrl.u32 %v1090, 16
      %v1148 = vrot.slane %v1146, 4
      %v1149 = vshll.u32 %v1090, 16
      %v1151 = vrot.slane %v1149, 5
      %v1152 = vor.u32 %v1148, %v1151
      %v1153 = vrot.slane %v1152, 4
      %v1155 = vshll.u32 %v1098, 16
      %v1157 = vrot.slane %v1155, 5
      %v1158 = vsel %vm729, %v1153, %v1157
      %v1160 = vshrl.u32 %v1091, 16
      %v1162 = vrot.slane %v1160, 4
      %v1163 = vshll.u32 %v1091, 16
      %v1165 = vrot.slane %v1163, 5
      %v1166 = vor.u32 %v1162, %v1165
      %v1167 = vrot.slane %v1166, 4
      %v1169 = vshll.u32 %v1099, 16
      %v1171 = vrot.slane %v1169, 5
      %v1172 = vsel %vm729, %v1167, %v1171
      %v1174 = vshrl.u32 %v1092, 16
      %v1176 = vrot.slane %v1174, 4
      %v1177 = vshll.u32 %v1092, 16
      %v1179 = vrot.slane %v1177, 5
      %v1180 = vor.u32 %v1176, %v1179
      %v1181 = vrot.slane %v1180, 4
      %v1183 = vshll.u32 %v1100, 16
      %v1185 = vrot.slane %v1183, 5
      %v1186 = vsel %vm729, %v1181, %v1185
      %v1188 = vshrl.u32 %v1093, 16
      %v1190 = vrot.slane %v1188, 4
      %v1191 = vshll.u32 %v1093, 16
      %v1193 = vrot.slane %v1191, 5
      %v1194 = vor.u32 %v1190, %v1193
      %v1195 = vrot.slane %v1194, 4
      %v1197 = vshll.u32 %v1101, 16
      %v1199 = vrot.slane %v1197, 5
      %v1200 = vsel %vm729, %v1195, %v1199
      %v1202 = vshrl.u32 %v1094, 16
      %v1204 = vrot.slane %v1202, 4
      %v1205 = vshll.u32 %v1094, 16
      %v1207 = vrot.slane %v1205, 5
      %v1208 = vor.u32 %v1204, %v1207
      %v1209 = vrot.slane %v1208, 4
      %v1211 = vshll.u32 %v1102, 16
      %v1213 = vrot.slane %v1211, 5
      %v1214 = vsel %vm729, %v1209, %v1213
      %v1215 = vld [vmem:[%s1086] sm:$0xe]
      %v1216 = vld [vmem:[%s1086 + $0x8] sm:$0xe]
      %v1217 = vld [vmem:[%s1086 + $0x10] sm:$0xe]
      %v1218 = vld [vmem:[%s1086 + $0x18] sm:$0xe]
      %v1219 = vld [vmem:[%s1086 + $0x20] sm:$0xe]
      %v1220 = vld [vmem:[%s1086 + $0x28] sm:$0xe]
      %v1221 = vld [vmem:[%s1086 + $0x30] sm:$0xe]
      %v1222 = vld [vmem:[%s1086 + $0x38] sm:$0xe]
      %v1239 = vrot.slane %v1215, 5
      %v1240 = vrot.slane %v1239, 4
      %v1241 = vrot.slane %v1095, 5
      %v1242 = vsel %vm868, %v1240, %v1241
      %v1243 = vrot.slane %v1216, 5
      %v1244 = vrot.slane %v1243, 4
      %v1245 = vrot.slane %v1096, 5
      %v1246 = vsel %vm868, %v1244, %v1245
      %v1247 = vrot.slane %v1217, 5
      %v1248 = vrot.slane %v1247, 4
      %v1249 = vrot.slane %v1097, 5
      %v1250 = vsel %vm868, %v1248, %v1249
      %v1251 = vrot.slane %v1218, 5
      %v1252 = vrot.slane %v1251, 4
      %v1253 = vrot.slane %v1098, 5
      %v1254 = vsel %vm868, %v1252, %v1253
      %v1255 = vrot.slane %v1219, 5
      %v1256 = vrot.slane %v1255, 4
      %v1257 = vrot.slane %v1099, 5
      %v1258 = vsel %vm868, %v1256, %v1257
      %v1259 = vrot.slane %v1220, 5
      %v1260 = vrot.slane %v1259, 4
      %v1261 = vrot.slane %v1100, 5
      %v1262 = vsel %vm868, %v1260, %v1261
      %v1263 = vrot.slane %v1221, 5
      %v1264 = vrot.slane %v1263, 4
      %v1265 = vrot.slane %v1101, 5
      %v1266 = vsel %vm868, %v1264, %v1265
      %v1267 = vrot.slane %v1222, 5
      %v1268 = vrot.slane %v1267, 4
      %v1269 = vrot.slane %v1102, 5
      %v1270 = vsel %vm868, %v1268, %v1269
      %v1279 = vunpack.c.l.b16 %v711
      %v1280 = vunpack.c.l.b16 %v712
      %v1281 = vunpack.c.l.b16 %v713
      %v1282 = vunpack.c.l.b16 %v714
      %v1283 = vunpack.c.l.b16 %v715
      %v1284 = vunpack.c.l.b16 %v716
      %v1285 = vunpack.c.l.b16 %v717
      %v1286 = vunpack.c.l.b16 %v718
      %v1287 = vpack.c.b16 %v1280, %v1279
      %v1288 = vpack.c.b16 %v1282, %v1281
      %v1289 = vpack.c.b16 %v1284, %v1283
      %v1290 = vpack.c.b16 %v1286, %v1285
      %v1291 = vunpack.c.l.b16 %v743
      %v1292 = vunpack.c.l.b16 %v757
      %v1293 = vunpack.c.l.b16 %v771
      %v1294 = vunpack.c.l.b16 %v785
      %v1295 = vunpack.c.l.b16 %v799
      %v1296 = vunpack.c.l.b16 %v813
      %v1297 = vunpack.c.l.b16 %v827
      %v1298 = vunpack.c.l.b16 %v841
      %v1299 = vpack.c.b16 %v1292, %v1291
      %v1300 = vpack.c.b16 %v1294, %v1293
      %v1301 = vpack.c.b16 %v1296, %v1295
      %v1302 = vpack.c.b16 %v1298, %v1297
      %1303 = vrot.lane.b32.xlu0 %v1299, 64
      %v1304 = vpop.permute.xlu0 %1303
      %1305 = vrot.lane.b32.xlu0 %v1300, 64
      %v1306 = vpop.permute.xlu0 %1305
      %1307 = vrot.lane.b32.xlu0 %v1301, 64
      %v1308 = vpop.permute.xlu0 %1307
      %1309 = vrot.lane.b32.xlu0 %v1302, 64
      %v1310 = vpop.permute.xlu0 %1309
      %v1311 = vunpack.c.l.b16 %v872
      %v1312 = vunpack.c.l.b16 %v876
      %v1313 = vunpack.c.l.b16 %v880
      %v1314 = vunpack.c.l.b16 %v884
      %v1315 = vunpack.c.l.b16 %v888
      %v1316 = vunpack.c.l.b16 %v892
      %v1317 = vunpack.c.l.b16 %v896
      %v1318 = vunpack.c.l.b16 %v900
      %v1319 = vpack.c.b16 %v1312, %v1311
      %v1320 = vpack.c.b16 %v1314, %v1313
      %v1321 = vpack.c.b16 %v1316, %v1315
      %v1322 = vpack.c.b16 %v1318, %v1317
      %v1331 = vunpack.c.l.b16 %v902
      %v1332 = vunpack.c.l.b16 %v903
      %v1333 = vunpack.c.l.b16 %v904
      %v1334 = vunpack.c.l.b16 %v905
      %v1335 = vunpack.c.l.b16 %v906
      %v1336 = vunpack.c.l.b16 %v907
      %v1337 = vunpack.c.l.b16 %v908
      %v1338 = vunpack.c.l.b16 %v909
      %v1339 = vpack.c.b16 %v1332, %v1331
      %v1340 = vpack.c.b16 %v1334, %v1333
      %v1341 = vpack.c.b16 %v1336, %v1335
      %v1342 = vpack.c.b16 %v1338, %v1337
      %1343 = vrot.lane.b32.xlu0 %v1339, 64
      %v1344 = vpop.permute.xlu0 %1343
      %1345 = vrot.lane.b32.xlu0 %v1340, 64
      %v1346 = vpop.permute.xlu0 %1345
      %1347 = vrot.lane.b32.xlu0 %v1341, 64
      %v1348 = vpop.permute.xlu0 %1347
      %1349 = vrot.lane.b32.xlu0 %v1342, 64
      %v1350 = vpop.permute.xlu0 %1349
      %v1351 = vunpack.c.l.b16 %v931
      %v1352 = vunpack.c.l.b16 %v945
      %v1353 = vunpack.c.l.b16 %v959
      %v1354 = vunpack.c.l.b16 %v973
      %v1355 = vunpack.c.l.b16 %v987
      %v1356 = vunpack.c.l.b16 %v1001
      %v1357 = vunpack.c.l.b16 %v1015
      %v1358 = vunpack.c.l.b16 %v1029
      %v1359 = vpack.c.b16 %v1352, %v1351
      %v1360 = vpack.c.b16 %v1354, %v1353
      %v1361 = vpack.c.b16 %v1356, %v1355
      %v1362 = vpack.c.b16 %v1358, %v1357
      %v1363 = vunpack.c.l.b16 %v1057
      %v1364 = vunpack.c.l.b16 %v1061
      %v1365 = vunpack.c.l.b16 %v1065
      %v1366 = vunpack.c.l.b16 %v1069
      %v1367 = vunpack.c.l.b16 %v1073
      %v1368 = vunpack.c.l.b16 %v1077
      %v1369 = vunpack.c.l.b16 %v1081
      %v1370 = vunpack.c.l.b16 %v1085
      %v1371 = vpack.c.b16 %v1364, %v1363
      %v1372 = vpack.c.b16 %v1366, %v1365
      %v1373 = vpack.c.b16 %v1368, %v1367
      %v1374 = vpack.c.b16 %v1370, %v1369
      %1375 = vrot.lane.b32.xlu0 %v1371, 64
      %v1376 = vpop.permute.xlu0 %1375
      %1377 = vrot.lane.b32.xlu0 %v1372, 64
      %v1378 = vpop.permute.xlu0 %1377
      %1379 = vrot.lane.b32.xlu0 %v1373, 64
      %v1380 = vpop.permute.xlu0 %1379
      %1381 = vrot.lane.b32.xlu0 %v1374, 64
      %v1382 = vpop.permute.xlu0 %1381
      %v1391 = vunpack.c.l.b16 %v1087
      %v1392 = vunpack.c.l.b16 %v1088
      %v1393 = vunpack.c.l.b16 %v1089
      %v1394 = vunpack.c.l.b16 %v1090
      %v1395 = vunpack.c.l.b16 %v1091
      %v1396 = vunpack.c.l.b16 %v1092
      %v1397 = vunpack.c.l.b16 %v1093
      %v1398 = vunpack.c.l.b16 %v1094
      %v1399 = vpack.c.b16 %v1392, %v1391
      %v1400 = vpack.c.b16 %v1394, %v1393
      %v1401 = vpack.c.b16 %v1396, %v1395
      %v1402 = vpack.c.b16 %v1398, %v1397
      %v1403 = vunpack.c.l.b16 %v1116
      %v1404 = vunpack.c.l.b16 %v1130
      %v1405 = vunpack.c.l.b16 %v1144
      %v1406 = vunpack.c.l.b16 %v1158
      %v1407 = vunpack.c.l.b16 %v1172
      %v1408 = vunpack.c.l.b16 %v1186
      %v1409 = vunpack.c.l.b16 %v1200
      %v1410 = vunpack.c.l.b16 %v1214
      %v1411 = vpack.c.b16 %v1404, %v1403
      %v1412 = vpack.c.b16 %v1406, %v1405
      %v1413 = vpack.c.b16 %v1408, %v1407
      %v1414 = vpack.c.b16 %v1410, %v1409
      %1415 = vrot.lane.b32.xlu0 %v1411, 64
      %v1416 = vpop.permute.xlu0 %1415
      %1417 = vrot.lane.b32.xlu0 %v1412, 64
      %v1418 = vpop.permute.xlu0 %1417
      %1419 = vrot.lane.b32.xlu0 %v1413, 64
      %v1420 = vpop.permute.xlu0 %1419
      %1421 = vrot.lane.b32.xlu0 %v1414, 64
      %v1422 = vpop.permute.xlu0 %1421
      %v1423 = vunpack.c.l.b16 %v1242
      %v1424 = vunpack.c.l.b16 %v1246
      %v1425 = vunpack.c.l.b16 %v1250
      %v1426 = vunpack.c.l.b16 %v1254
      %v1427 = vunpack.c.l.b16 %v1258
      %v1428 = vunpack.c.l.b16 %v1262
      %v1429 = vunpack.c.l.b16 %v1266
      %v1430 = vunpack.c.l.b16 %v1270
      %v1431 = vpack.c.b16 %v1424, %v1423
      %v1432 = vpack.c.b16 %v1426, %v1425
      %v1433 = vpack.c.b16 %v1428, %v1427
      %v1434 = vpack.c.b16 %v1430, %v1429
      %vm1435 = vcmask 523264
      %v1438 = vsel %vm1435, %v1287, %v1304
      %v1442 = vsel %vm1435, %v1288, %v1306
      %v1446 = vsel %vm1435, %v1289, %v1308
      %v1450 = vsel %vm1435, %v1290, %v1310
      %v1454 = vsel %vm1435, %v1319, %v1344
      %v1458 = vsel %vm1435, %v1320, %v1346
      %v1462 = vsel %vm1435, %v1321, %v1348
      %v1466 = vsel %vm1435, %v1322, %v1350
      %v1470 = vsel %vm1435, %v1359, %v1376
      %v1474 = vsel %vm1435, %v1360, %v1378
      %v1478 = vsel %vm1435, %v1361, %v1380
      %v1482 = vsel %vm1435, %v1362, %v1382
      %v1486 = vsel %vm1435, %v1399, %v1416
      %v1490 = vsel %vm1435, %v1400, %v1418
      %v1494 = vsel %vm1435, %v1401, %v1420
      %v1498 = vsel %vm1435, %v1402, %v1422
      %v1500 = vld [vmem:[%s352] sm:$0xf]
      %v1501 = vld [vmem:[%s352 + $0x4] sm:$0xf]
      %v1502 = vld [vmem:[%s352 + $0x8] sm:$0xf]
      %v1503 = vld [vmem:[%s352 + $0xc] sm:$0xf]
      %v1504 = vld [vmem:[%s352 + $0x10] sm:$0xf]
      %v1505 = vld [vmem:[%s352 + $0x14] sm:$0xf]
      %v1506 = vld [vmem:[%s352 + $0x18] sm:$0xf]
      %v1507 = vld [vmem:[%s352 + $0x1c] sm:$0xf]
      %v1508 = vld [vmem:[%s352 + $0x20] sm:$0xf]
      %v1509 = vld [vmem:[%s352 + $0x24] sm:$0xf]
      %v1510 = vld [vmem:[%s352 + $0x28] sm:$0xf]
      %v1511 = vld [vmem:[%s352 + $0x2c] sm:$0xf]
      %v1512 = vld [vmem:[%s352 + $0x30] sm:$0xf]
      %v1513 = vld [vmem:[%s352 + $0x34] sm:$0xf]
      %v1514 = vld [vmem:[%s352 + $0x38] sm:$0xf]
      %v1515 = vld [vmem:[%s352 + $0x3c] sm:$0xf]
      %v1516 = vld [vmem:[%s352 + $0x40] sm:$0xf]
      %v1517 = vld [vmem:[%s352 + $0x44] sm:$0xf]
      %v1518 = vld [vmem:[%s352 + $0x48] sm:$0xf]
      %v1519 = vld [vmem:[%s352 + $0x4c] sm:$0xf]
      %v1520 = vld [vmem:[%s352 + $0x50] sm:$0xf]
      %v1521 = vld [vmem:[%s352 + $0x54] sm:$0xf]
      %v1522 = vld [vmem:[%s352 + $0x58] sm:$0xf]
      %v1523 = vld [vmem:[%s352 + $0x5c] sm:$0xf]
      %v1524 = vld [vmem:[%s352 + $0x60] sm:$0xf]
      %v1525 = vld [vmem:[%s352 + $0x64] sm:$0xf]
      %v1526 = vld [vmem:[%s352 + $0x68] sm:$0xf]
      %v1527 = vld [vmem:[%s352 + $0x6c] sm:$0xf]
      %v1528 = vld [vmem:[%s352 + $0x70] sm:$0xf]
      %v1529 = vld [vmem:[%s352 + $0x74] sm:$0xf]
      %v1530 = vld [vmem:[%s352 + $0x78] sm:$0xf]
      %v1531 = vld [vmem:[%s352 + $0x7c] sm:$0xf]
      %v1532 = vld [vmem:[%s352 + $0x80] sm:$0xf]
      %v1533 = vld [vmem:[%s352 + $0x84] sm:$0xf]
      %v1534 = vld [vmem:[%s352 + $0x88] sm:$0xf]
      %v1535 = vld [vmem:[%s352 + $0x8c] sm:$0xf]
      %v1536 = vld [vmem:[%s352 + $0x90] sm:$0xf]
      %v1537 = vld [vmem:[%s352 + $0x94] sm:$0xf]
      %v1538 = vld [vmem:[%s352 + $0x98] sm:$0xf]
      %v1539 = vld [vmem:[%s352 + $0x9c] sm:$0xf]
      %v1540 = vld [vmem:[%s352 + $0xa0] sm:$0xf]
      %v1541 = vld [vmem:[%s352 + $0xa4] sm:$0xf]
      %v1542 = vld [vmem:[%s352 + $0xa8] sm:$0xf]
      %v1543 = vld [vmem:[%s352 + $0xac] sm:$0xf]
      %v1544 = vld [vmem:[%s352 + $0xb0] sm:$0xf]
      %v1545 = vld [vmem:[%s352 + $0xb4] sm:$0xf]
      %v1546 = vld [vmem:[%s352 + $0xb8] sm:$0xf]
      %v1547 = vld [vmem:[%s352 + $0xbc] sm:$0xf]
      %v1548 = vld [vmem:[%s352 + $0xc0] sm:$0xf]
      %v1549 = vld [vmem:[%s352 + $0xc4] sm:$0xf]
      %v1550 = vld [vmem:[%s352 + $0xc8] sm:$0xf]
      %v1551 = vld [vmem:[%s352 + $0xcc] sm:$0xf]
      %v1552 = vld [vmem:[%s352 + $0xd0] sm:$0xf]
      %v1553 = vld [vmem:[%s352 + $0xd4] sm:$0xf]
      %v1554 = vld [vmem:[%s352 + $0xd8] sm:$0xf]
      %v1555 = vld [vmem:[%s352 + $0xdc] sm:$0xf]
      %v1556 = vld [vmem:[%s352 + $0xe0] sm:$0xf]
      %v1557 = vld [vmem:[%s352 + $0xe4] sm:$0xf]
      %v1558 = vld [vmem:[%s352 + $0xe8] sm:$0xf]
      %v1559 = vld [vmem:[%s352 + $0xec] sm:$0xf]
      %v1560 = vld [vmem:[%s352 + $0xf0] sm:$0xf]
      %v1561 = vld [vmem:[%s352 + $0xf4] sm:$0xf]
      %v1562 = vld [vmem:[%s352 + $0xf8] sm:$0xf]
      %v1563 = vld [vmem:[%s352 + $0xfc] sm:$0xf]
      %v1564 = vld [vmem:[%s352 + $0x100] sm:$0xf]
      %v1565 = vld [vmem:[%s352 + $0x104] sm:$0xf]
      %v1566 = vld [vmem:[%s352 + $0x108] sm:$0xf]
      %v1567 = vld [vmem:[%s352 + $0x10c] sm:$0xf]
      %v1568 = vld [vmem:[%s352 + $0x110] sm:$0xf]
      %v1569 = vld [vmem:[%s352 + $0x114] sm:$0xf]
      %v1570 = vld [vmem:[%s352 + $0x118] sm:$0xf]
      %v1571 = vld [vmem:[%s352 + $0x11c] sm:$0xf]
      %s1572 = scalar_lea.vmem %s5, %s24
      %v1573 = vld [vmem:[%s1572] sm:$0x1]
      %v1575 = vlaneseq
      %v1576 = vshrl.u32 %v1575, 7
      %v1577 = vsub.s32 0, %v1576
      %v1578 = vrot.slane %v1573, %v1577
      %v1652 = vunpack.c.l.b16 %v1500
      %v1653 = vunpack.c.l.b16 %v1501
      %v1654 = vunpack.c.l.b16 %v1502
      %v1655 = vunpack.c.l.b16 %v1503
      %v1656 = vunpack.c.l.b16 %v1504
      %v1657 = vunpack.c.l.b16 %v1505
      %v1658 = vunpack.c.l.b16 %v1506
      %v1659 = vunpack.c.l.b16 %v1507
      %v1660 = vunpack.c.l.b16 %v1508
      %v1661 = vunpack.c.l.b16 %v1509
      %v1662 = vunpack.c.l.b16 %v1510
      %v1663 = vunpack.c.l.b16 %v1511
      %v1664 = vunpack.c.l.b16 %v1512
      %v1665 = vunpack.c.l.b16 %v1513
      %v1666 = vunpack.c.l.b16 %v1514
      %v1667 = vunpack.c.l.b16 %v1515
      %v1668 = vunpack.c.l.b16 %v1516
      %v1669 = vunpack.c.l.b16 %v1517
      %v1670 = vunpack.c.l.b16 %v1518
      %v1671 = vunpack.c.l.b16 %v1519
      %v1672 = vunpack.c.l.b16 %v1520
      %v1673 = vunpack.c.l.b16 %v1521
      %v1674 = vunpack.c.l.b16 %v1522
      %v1675 = vunpack.c.l.b16 %v1523
      %v1676 = vunpack.c.l.b16 %v1524
      %v1677 = vunpack.c.l.b16 %v1525
      %v1678 = vunpack.c.l.b16 %v1526
      %v1679 = vunpack.c.l.b16 %v1527
      %v1680 = vunpack.c.l.b16 %v1528
      %v1681 = vunpack.c.l.b16 %v1529
      %v1682 = vunpack.c.l.b16 %v1530
      %v1683 = vunpack.c.l.b16 %v1531
      %v1684 = vunpack.c.l.b16 %v1532
      %v1685 = vunpack.c.l.b16 %v1533
      %v1686 = vunpack.c.l.b16 %v1534
      %v1687 = vunpack.c.l.b16 %v1535
      %v1688 = vunpack.c.l.b16 %v1536
      %v1689 = vunpack.c.l.b16 %v1537
      %v1690 = vunpack.c.l.b16 %v1538
      %v1691 = vunpack.c.l.b16 %v1539
      %v1692 = vunpack.c.l.b16 %v1540
      %v1693 = vunpack.c.l.b16 %v1541
      %v1694 = vunpack.c.l.b16 %v1542
      %v1695 = vunpack.c.l.b16 %v1543
      %v1696 = vunpack.c.l.b16 %v1544
      %v1697 = vunpack.c.l.b16 %v1545
      %v1698 = vunpack.c.l.b16 %v1546
      %v1699 = vunpack.c.l.b16 %v1547
      %v1700 = vunpack.c.l.b16 %v1548
      %v1701 = vunpack.c.l.b16 %v1549
      %v1702 = vunpack.c.l.b16 %v1550
      %v1703 = vunpack.c.l.b16 %v1551
      %v1704 = vunpack.c.l.b16 %v1552
      %v1705 = vunpack.c.l.b16 %v1553
      %v1706 = vunpack.c.l.b16 %v1554
      %v1707 = vunpack.c.l.b16 %v1555
      %v1708 = vunpack.c.l.b16 %v1556
      %v1709 = vunpack.c.l.b16 %v1557
      %v1710 = vunpack.c.l.b16 %v1558
      %v1711 = vunpack.c.l.b16 %v1559
      %v1712 = vunpack.c.l.b16 %v1560
      %v1713 = vunpack.c.l.b16 %v1561
      %v1714 = vunpack.c.l.b16 %v1562
      %v1715 = vunpack.c.l.b16 %v1563
      %v1716 = vunpack.c.l.b16 %v1564
      %v1717 = vunpack.c.l.b16 %v1565
      %v1718 = vunpack.c.l.b16 %v1566
      %v1719 = vunpack.c.l.b16 %v1567
      %v1720 = vunpack.c.l.b16 %v1568
      %v1721 = vunpack.c.l.b16 %v1569
      %v1722 = vunpack.c.l.b16 %v1570
      %v1723 = vunpack.c.l.b16 %v1571
      %v1724 = vpack.c.b16 %v1653, %v1652
      %v1725 = vpack.c.b16 %v1655, %v1654
      %v1726 = vpack.c.b16 %v1657, %v1656
      %v1727 = vpack.c.b16 %v1659, %v1658
      %v1728 = vpack.c.b16 %v1661, %v1660
      %v1729 = vpack.c.b16 %v1663, %v1662
      %v1730 = vpack.c.b16 %v1665, %v1664
      %v1731 = vpack.c.b16 %v1667, %v1666
      %v1732 = vpack.c.b16 %v1669, %v1668
      %v1733 = vpack.c.b16 %v1671, %v1670
      %v1734 = vpack.c.b16 %v1673, %v1672
      %v1735 = vpack.c.b16 %v1675, %v1674
      %v1736 = vpack.c.b16 %v1677, %v1676
      %v1737 = vpack.c.b16 %v1679, %v1678
      %v1738 = vpack.c.b16 %v1681, %v1680
      %v1739 = vpack.c.b16 %v1683, %v1682
      %v1740 = vpack.c.b16 %v1685, %v1684
      %v1741 = vpack.c.b16 %v1687, %v1686
      %v1742 = vpack.c.b16 %v1689, %v1688
      %v1743 = vpack.c.b16 %v1691, %v1690
      %v1744 = vpack.c.b16 %v1693, %v1692
      %v1745 = vpack.c.b16 %v1695, %v1694
      %v1746 = vpack.c.b16 %v1697, %v1696
      %v1747 = vpack.c.b16 %v1699, %v1698
      %v1748 = vpack.c.b16 %v1701, %v1700
      %v1749 = vpack.c.b16 %v1703, %v1702
      %v1750 = vpack.c.b16 %v1705, %v1704
      %v1751 = vpack.c.b16 %v1707, %v1706
      %v1752 = vpack.c.b16 %v1709, %v1708
      %v1753 = vpack.c.b16 %v1711, %v1710
      %v1754 = vpack.c.b16 %v1713, %v1712
      %v1755 = vpack.c.b16 %v1715, %v1714
      %v1756 = vpack.c.b16 %v1717, %v1716
      %v1757 = vpack.c.b16 %v1719, %v1718
      %v1758 = vpack.c.b16 %v1721, %v1720
      %v1759 = vpack.c.b16 %v1723, %v1722
      %v1797 = vsel %vm1435, %v1431, 0
      %v1800 = vsel %vm1435, %v1432, 0
      %v1803 = vsel %vm1435, %v1433, 0
      %v1806 = vsel %vm1435, %v1434, 0
      %1808 = vmatprep.subr.bf16.mxu0 0
      %1809 = vmatpush1.bf16.msra.mxu0 %v1731
      %1810 = vmatprep.subr.bf16.mxu0 0
      %1811 = vmatpush1.bf16.msra.mxu0 %v1730
      %1812 = vmatprep.subr.bf16.mxu0 0
      %1813 = vmatpush1.bf16.msra.mxu0 %v1729
      %1814 = vmatprep.subr.bf16.mxu0 0
      %1815 = vmatpush1.bf16.msra.mxu0 %v1728
      %1816 = vmatprep.subr.bf16.mxu0 0
      %1817 = vmatpush1.bf16.msra.mxu0 %v1727
      %1818 = vmatprep.subr.bf16.mxu0 0
      %1819 = vmatpush1.bf16.msra.mxu0 %v1726
      %1820 = vmatprep.subr.bf16.mxu0 0
      %1821 = vmatpush1.bf16.msra.mxu0 %v1725
      %1822 = vmatprep.subr.bf16.mxu0 0
      %1823 = vmatpush1.bf16.msra.mxu0 %v1724
      %1824 = vmatprep.subr.bf16.mxu0 0
      %1825 = vmatpush2.bf16.msra.mxu0 %v1739
      %1826 = vmatprep.subr.bf16.mxu0 0
      %1827 = vmatpush2.bf16.msra.mxu0 %v1738
      %1828 = vmatprep.subr.bf16.mxu0 0
      %1829 = vmatpush2.bf16.msra.mxu0 %v1737
      %1830 = vmatprep.subr.bf16.mxu0 0
      %1831 = vmatpush2.bf16.msra.mxu0 %v1736
      %1832 = vmatprep.subr.bf16.mxu0 0
      %1833 = vmatpush2.bf16.msra.mxu0 %v1735
      %1834 = vmatprep.subr.bf16.mxu0 0
      %1835 = vmatpush2.bf16.msra.mxu0 %v1734
      %1836 = vmatprep.subr.bf16.mxu0 0
      %1837 = vmatpush2.bf16.msra.mxu0 %v1733
      %1838 = vmatprep.subr.bf16.mxu0 0
      %1839 = vmatpush2.bf16.msra.mxu0 %v1732
      %1840 = vmatprep.mubr.bf16.mxu0 %v1454
      %1841 = vmatmul.mubr.bf16.gmra.mxu0 %v1438
      %v1842 = vpop.f32.mrf.mxu0
      %v1843 = vadd.f32 %v1578, %v1842
      %v1844 = vpop.f32.mrf.mxu0
      %v1845 = vpop.f32.mrf.mxu0
      %v1846 = vadd.f32 %v1578, %v1845
      %v1847 = vpop.f32.mrf.mxu0
      %1848 = vmatprep.mubr.bf16.mxu0 %v1458
      %1849 = vmatmul.mubr.bf16.gmra.mxu0 %v1442
      %v1850 = vpop.f32.mrf.mxu0
      %v1851 = vadd.f32 %v1578, %v1850
      %v1852 = vpop.f32.mrf.mxu0
      %v1853 = vpop.f32.mrf.mxu0
      %v1854 = vadd.f32 %v1578, %v1853
      %v1855 = vpop.f32.mrf.mxu0
      %1856 = vmatprep.mubr.bf16.mxu0 %v1462
      %1857 = vmatmul.mubr.bf16.gmra.mxu0 %v1446
      %v1858 = vpop.f32.mrf.mxu0
      %v1859 = vadd.f32 %v1578, %v1858
      %v1860 = vpop.f32.mrf.mxu0
      %v1861 = vpop.f32.mrf.mxu0
      %v1862 = vadd.f32 %v1578, %v1861
      %v1863 = vpop.f32.mrf.mxu0
      %1864 = vmatprep.mubr.bf16.mxu0 %v1466
      %1865 = vmatmul.mubr.bf16.gmra.mxu0 %v1450
      %v1866 = vpop.f32.mrf.mxu0
      %v1867 = vadd.f32 %v1578, %v1866
      %v1868 = vpop.f32.mrf.mxu0
      %v1869 = vpop.f32.mrf.mxu0
      %v1870 = vadd.f32 %v1578, %v1869
      %v1871 = vpop.f32.mrf.mxu0
      %1872 = vdwg.mxu0
      %1873 = vmatprep.subr.bf16.mxu0 0
      %1874 = vmatpush1.bf16.msra.mxu0 %v1747
      %1875 = vmatprep.subr.bf16.mxu0 0
      %1876 = vmatpush1.bf16.msra.mxu0 %v1746
      %1877 = vmatprep.subr.bf16.mxu0 0
      %1878 = vmatpush1.bf16.msra.mxu0 %v1745
      %1879 = vmatprep.subr.bf16.mxu0 0
      %1880 = vmatpush1.bf16.msra.mxu0 %v1744
      %1881 = vmatprep.subr.bf16.mxu0 0
      %1882 = vmatpush1.bf16.msra.mxu0 %v1743
      %1883 = vmatprep.subr.bf16.mxu0 0
      %1884 = vmatpush1.bf16.msra.mxu0 %v1742
      %1885 = vmatprep.subr.bf16.mxu0 0
      %1886 = vmatpush1.bf16.msra.mxu0 %v1741
      %1887 = vmatprep.subr.bf16.mxu0 0
      %1888 = vmatpush1.bf16.msra.mxu0 %v1740
      %1889 = vmatprep.subr.bf16.mxu0 0
      %1890 = vmatpush2.bf16.msra.mxu0 %v1755
      %1891 = vmatprep.subr.bf16.mxu0 0
      %1892 = vmatpush2.bf16.msra.mxu0 %v1754
      %1893 = vmatprep.subr.bf16.mxu0 0
      %1894 = vmatpush2.bf16.msra.mxu0 %v1753
      %1895 = vmatprep.subr.bf16.mxu0 0
      %1896 = vmatpush2.bf16.msra.mxu0 %v1752
      %1897 = vmatprep.subr.bf16.mxu0 0
      %1898 = vmatpush2.bf16.msra.mxu0 %v1751
      %1899 = vmatprep.subr.bf16.mxu0 0
      %1900 = vmatpush2.bf16.msra.mxu0 %v1750
      %1901 = vmatprep.subr.bf16.mxu0 0
      %1902 = vmatpush2.bf16.msra.mxu0 %v1749
      %1903 = vmatprep.subr.bf16.mxu0 0
      %1904 = vmatpush2.bf16.msra.mxu0 %v1748
      %1905 = vmatprep.mubr.bf16.mxu0 %v1486
      %1906 = vmatmul.mubr.bf16.gmra.mxu0 %v1470
      %v1907 = vpop.f32.mrf.mxu0
      %v1908 = vadd.f32 %v1843, %v1907
      %v1909 = vpop.f32.mrf.mxu0
      %v1910 = vpop.f32.mrf.mxu0
      %v1911 = vadd.f32 %v1846, %v1910
      %v1912 = vpop.f32.mrf.mxu0
      %1913 = vmatprep.mubr.bf16.mxu0 %v1490
      %1914 = vmatmul.mubr.bf16.gmra.mxu0 %v1474
      %v1915 = vpop.f32.mrf.mxu0
      %v1916 = vadd.f32 %v1851, %v1915
      %v1917 = vpop.f32.mrf.mxu0
      %v1918 = vpop.f32.mrf.mxu0
      %v1919 = vadd.f32 %v1854, %v1918
      %v1920 = vpop.f32.mrf.mxu0
      %1921 = vmatprep.mubr.bf16.mxu0 %v1494
      %1922 = vmatmul.mubr.bf16.gmra.mxu0 %v1478
      %v1923 = vpop.f32.mrf.mxu0
      %v1924 = vadd.f32 %v1859, %v1923
      %v1925 = vpop.f32.mrf.mxu0
      %v1926 = vpop.f32.mrf.mxu0
      %v1927 = vadd.f32 %v1862, %v1926
      %v1928 = vpop.f32.mrf.mxu0
      %1929 = vmatprep.mubr.bf16.mxu0 %v1498
      %1930 = vmatmul.mubr.bf16.gmra.mxu0 %v1482
      %v1931 = vpop.f32.mrf.mxu0
      %v1932 = vadd.f32 %v1867, %v1931
      %v1933 = vpop.f32.mrf.mxu0
      %v1934 = vpop.f32.mrf.mxu0
      %v1935 = vadd.f32 %v1870, %v1934
      %v1936 = vpop.f32.mrf.mxu0
      %1937 = vdwg.mxu0
      %1938 = vmatprep.subr.bf16.mxu0 0
      %1939 = vmatpush1.bf16.msra.mxu0 0
      %1940 = vmatprep.subr.bf16.mxu0 0
      %1941 = vmatpush1.bf16.msra.mxu0 0
      %1942 = vmatprep.subr.bf16.mxu0 0
      %1943 = vmatpush1.bf16.msra.mxu0 0
      %1944 = vmatprep.subr.bf16.mxu0 0
      %1945 = vmatpush1.bf16.msra.mxu0 0
      %1946 = vmatprep.subr.bf16.mxu0 0
      %1947 = vmatpush1.bf16.msra.mxu0 %v1759
      %1948 = vmatprep.subr.bf16.mxu0 0
      %1949 = vmatpush1.bf16.msra.mxu0 %v1758
      %1950 = vmatprep.subr.bf16.mxu0 0
      %1951 = vmatpush1.bf16.msra.mxu0 %v1757
      %1952 = vmatprep.subr.bf16.mxu0 0
      %1953 = vmatpush1.bf16.msra.mxu0 %v1756
      %1954 = vmatprep.subr.bf16.mxu0 0
      %1955 = vmatpush2.bf16.msra.mxu0 0
      %1956 = vmatprep.subr.bf16.mxu0 0
      %1957 = vmatpush2.bf16.msra.mxu0 0
      %1958 = vmatprep.subr.bf16.mxu0 0
      %1959 = vmatpush2.bf16.msra.mxu0 0
      %1960 = vmatprep.subr.bf16.mxu0 0
      %1961 = vmatpush2.bf16.msra.mxu0 0
      %1962 = vmatprep.subr.bf16.mxu0 0
      %1963 = vmatpush2.bf16.msra.mxu0 0
      %1964 = vmatprep.subr.bf16.mxu0 0
      %1965 = vmatpush2.bf16.msra.mxu0 0
      %1966 = vmatprep.subr.bf16.mxu0 0
      %1967 = vmatpush2.bf16.msra.mxu0 0
      %1968 = vmatprep.subr.bf16.mxu0 0
      %1969 = vmatpush2.bf16.msra.mxu0 0
      %1970 = vmatprep.mubr.bf16.mxu0 0
      %1971 = vmatmul.mubr.bf16.gmra.mxu0 %v1797
      %v1972 = vpop.f32.mrf.mxu0
      %v1973 = vadd.f32 %v1908, %v1972
      %v1974 = vpop.f32.mrf.mxu0
      %v1975 = vpop.f32.mrf.mxu0
      %v1976 = vadd.f32 %v1911, %v1975
      %v1977 = vpop.f32.mrf.mxu0
      %1978 = vmatprep.mubr.bf16.mxu0 0
      %1979 = vmatmul.mubr.bf16.gmra.mxu0 %v1800
      %v1980 = vpop.f32.mrf.mxu0
      %v1981 = vadd.f32 %v1916, %v1980
      %v1982 = vpop.f32.mrf.mxu0
      %v1983 = vpop.f32.mrf.mxu0
      %v1984 = vadd.f32 %v1919, %v1983
      %v1985 = vpop.f32.mrf.mxu0
      %1986 = vmatprep.mubr.bf16.mxu0 0
      %1987 = vmatmul.mubr.bf16.gmra.mxu0 %v1803
      %v1988 = vpop.f32.mrf.mxu0
      %v1989 = vadd.f32 %v1924, %v1988
      %v1990 = vpop.f32.mrf.mxu0
      %v1991 = vpop.f32.mrf.mxu0
      %v1992 = vadd.f32 %v1927, %v1991
      %v1993 = vpop.f32.mrf.mxu0
      %1994 = vmatprep.mubr.bf16.mxu0 0
      %1995 = vmatmul.mubr.bf16.gmra.mxu0 %v1806
      %v1996 = vpop.f32.mrf.mxu0
      %v1997 = vadd.f32 %v1932, %v1996
      %v1998 = vpop.f32.mrf.mxu0
      %v1999 = vpop.f32.mrf.mxu0
      %v2000 = vadd.f32 %v1935, %v1999
      %v2001 = vpop.f32.mrf.mxu0
      %2002 = vdwg.mxu0
      %v2003 = vmax.f32 %v1973, 0.0
      %v2004 = vmax.f32 %v1976, 0.0
      %v2005 = vmax.f32 %v1981, 0.0
      %v2006 = vmax.f32 %v1984, 0.0
      %v2007 = vmax.f32 %v1989, 0.0
      %v2008 = vmax.f32 %v1992, 0.0
      %v2009 = vmax.f32 %v1997, 0.0
      %v2010 = vmax.f32 %v2000, 0.0
      %v2011 = vpack.c.bf16 %v2003, %v2003
      %v2012 = vpack.c.bf16 %v2004, %v2004
      %v2013 = vpack.c.bf16 %v2005, %v2005
      %v2014 = vpack.c.bf16 %v2006, %v2006
      %v2015 = vpack.c.bf16 %v2007, %v2007
      %v2016 = vpack.c.bf16 %v2008, %v2008
      %v2017 = vpack.c.bf16 %v2009, %v2009
      %v2018 = vpack.c.bf16 %v2010, %v2010
      %v2027 = vunpack.c.l.b16 %v2011
      %v2028 = vunpack.c.l.b16 %v2012
      %v2029 = vunpack.c.l.b16 %v2013
      %v2030 = vunpack.c.l.b16 %v2014
      %v2031 = vunpack.c.l.b16 %v2015
      %v2032 = vunpack.c.l.b16 %v2016
      %v2033 = vunpack.c.l.b16 %v2017
      %v2034 = vunpack.c.l.b16 %v2018
      %v2035 = vpack.c.b16 %v2027, %v2027
      %v2036 = vpack.c.b16 %v2028, %v2028
      %v2037 = vpack.c.b16 %v2029, %v2029
      %v2038 = vpack.c.b16 %v2030, %v2030
      %v2039 = vpack.c.b16 %v2031, %v2031
      %v2040 = vpack.c.b16 %v2032, %v2032
      %v2041 = vpack.c.b16 %v2033, %v2033
      %v2042 = vpack.c.b16 %v2034, %v2034
      %v2044 = vshrl.u32 %v2035, 16
      %v2046 = vrot.slane %v2044, 7
      %v2047 = vshll.u32 %v2035, 16
      %v2049 = vor.u32 %v2046, %v2047
      %v2050 = vrot.slane %v2046, 4
      %v2052 = vshrl.u32 %v2036, 16
      %v2054 = vrot.slane %v2052, 7
      %v2055 = vshll.u32 %v2036, 16
      %v2057 = vor.u32 %v2054, %v2055
      %v2058 = vrot.slane %v2054, 4
      %v2060 = vshrl.u32 %v2037, 16
      %v2062 = vrot.slane %v2060, 7
      %v2063 = vshll.u32 %v2037, 16
      %v2065 = vor.u32 %v2062, %v2063
      %v2066 = vrot.slane %v2062, 4
      %v2068 = vshrl.u32 %v2038, 16
      %v2070 = vrot.slane %v2068, 7
      %v2071 = vshll.u32 %v2038, 16
      %v2073 = vor.u32 %v2070, %v2071
      %v2074 = vrot.slane %v2070, 4
      %v2076 = vshrl.u32 %v2039, 16
      %v2078 = vrot.slane %v2076, 7
      %v2079 = vshll.u32 %v2039, 16
      %v2081 = vor.u32 %v2078, %v2079
      %v2082 = vrot.slane %v2078, 4
      %v2084 = vshrl.u32 %v2040, 16
      %v2086 = vrot.slane %v2084, 7
      %v2087 = vshll.u32 %v2040, 16
      %v2089 = vor.u32 %v2086, %v2087
      %v2090 = vrot.slane %v2086, 4
      %v2092 = vshrl.u32 %v2041, 16
      %v2094 = vrot.slane %v2092, 7
      %v2095 = vshll.u32 %v2041, 16
      %v2097 = vor.u32 %v2094, %v2095
      %v2098 = vrot.slane %v2094, 4
      %v2100 = vshrl.u32 %v2042, 16
      %v2102 = vrot.slane %v2100, 7
      %v2103 = vshll.u32 %v2042, 16
      %v2105 = vor.u32 %v2102, %v2103
      %v2106 = vrot.slane %v2102, 4
      %vm2123 = vcmask 519168
      %vm2124 = vsmask.f32 7938
      %vm2125 = vmand %vm2123, %vm2124
      %v2126 = vsel %vm2125, %v2049, %v902
      %2127 = vst [vmem:[%s901] sm:$0xf] %v2126
      %vm2128 = vcmask 516096
      %vm2129 = vsmask.f32 256
      %vm2130 = vmand %vm2128, %vm2129
      %v2131 = vld [vmem:[%s901 + $0x4] sm:$0x1]
      %v2132 = vsel %vm2130, %v2050, %v2131
      %2133 = vst [vmem:[%s901 + $0x4] sm:$0x1] %v2132
      %v2134 = vld [vmem:[%s901 + $0x8] sm:$0xf]
      %v2135 = vsel %vm2125, %v2057, %v2134
      %2136 = vst [vmem:[%s901 + $0x8] sm:$0xf] %v2135
      %v2137 = vld [vmem:[%s901 + $0xc] sm:$0x1]
      %v2138 = vsel %vm2130, %v2058, %v2137
      %2139 = vst [vmem:[%s901 + $0xc] sm:$0x1] %v2138
      %v2140 = vld [vmem:[%s901 + $0x10] sm:$0xf]
      %v2141 = vsel %vm2125, %v2065, %v2140
      %2142 = vst [vmem:[%s901 + $0x10] sm:$0xf] %v2141
      %v2143 = vld [vmem:[%s901 + $0x14] sm:$0x1]
      %v2144 = vsel %vm2130, %v2066, %v2143
      %2145 = vst [vmem:[%s901 + $0x14] sm:$0x1] %v2144
      %v2146 = vld [vmem:[%s901 + $0x18] sm:$0xf]
      %v2147 = vsel %vm2125, %v2073, %v2146
      %2148 = vst [vmem:[%s901 + $0x18] sm:$0xf] %v2147
      %v2149 = vld [vmem:[%s901 + $0x1c] sm:$0x1]
      %v2150 = vsel %vm2130, %v2074, %v2149
      %2151 = vst [vmem:[%s901 + $0x1c] sm:$0x1] %v2150
      %v2152 = vld [vmem:[%s901 + $0x20] sm:$0xf]
      %v2153 = vsel %vm2125, %v2081, %v2152
      %2154 = vst [vmem:[%s901 + $0x20] sm:$0xf] %v2153
      %v2155 = vld [vmem:[%s901 + $0x24] sm:$0x1]
      %v2156 = vsel %vm2130, %v2082, %v2155
      %2157 = vst [vmem:[%s901 + $0x24] sm:$0x1] %v2156
      %v2158 = vld [vmem:[%s901 + $0x28] sm:$0xf]
      %v2159 = vsel %vm2125, %v2089, %v2158
      %2160 = vst [vmem:[%s901 + $0x28] sm:$0xf] %v2159
      %v2161 = vld [vmem:[%s901 + $0x2c] sm:$0x1]
      %v2162 = vsel %vm2130, %v2090, %v2161
      %2163 = vst [vmem:[%s901 + $0x2c] sm:$0x1] %v2162
      %v2164 = vld [vmem:[%s901 + $0x30] sm:$0xf]
      %v2165 = vsel %vm2125, %v2097, %v2164
      %2166 = vst [vmem:[%s901 + $0x30] sm:$0xf] %v2165
      %v2167 = vld [vmem:[%s901 + $0x34] sm:$0x1]
      %v2168 = vsel %vm2130, %v2098, %v2167
      %2169 = vst [vmem:[%s901 + $0x34] sm:$0x1] %v2168
      %v2170 = vld [vmem:[%s901 + $0x38] sm:$0xf]
      %v2171 = vsel %vm2125, %v2105, %v2170
      %2172 = vst [vmem:[%s901 + $0x38] sm:$0xf] %v2171
      %v2173 = vld [vmem:[%s901 + $0x3c] sm:$0x1]
      %v2174 = vsel %vm2130, %v2106, %v2173
      %2175 = vst [vmem:[%s901 + $0x3c] sm:$0x1] %v2174
      %p2176 = scmp.eq.s32.totalorder %s24, 27
      // Predicated region
      $region57: #{rednet30_forward.1} parent=51 // pred_check
        %p2177 = pneg %p2176
      $region58: #{rednet30_forward.1} parent=51 // pred_check_branch
        %2179 = sbr.rel (%p2177) target = $region60
      $region59: #{rednet30_forward.1} parent=51 // pred_region
        %v2180 = vld [vmem:[%s901] sm:$0xf]
        %v2181 = vld [vmem:[%s901 + $0x4] sm:$0x1]
        %v2182 = vld [vmem:[%s901 + $0x8] sm:$0xf]
        %v2183 = vld [vmem:[%s901 + $0xc] sm:$0x1]
        %v2184 = vld [vmem:[%s901 + $0x10] sm:$0xf]
        %v2185 = vld [vmem:[%s901 + $0x14] sm:$0x1]
        %v2186 = vld [vmem:[%s901 + $0x18] sm:$0xf]
        %v2187 = vld [vmem:[%s901 + $0x1c] sm:$0x1]
        %v2188 = vld [vmem:[%s901 + $0x20] sm:$0xf]
        %v2189 = vld [vmem:[%s901 + $0x24] sm:$0x1]
        %v2190 = vld [vmem:[%s901 + $0x28] sm:$0xf]
        %v2191 = vld [vmem:[%s901 + $0x2c] sm:$0x1]
        %v2192 = vld [vmem:[%s901 + $0x30] sm:$0xf]
        %v2193 = vld [vmem:[%s901 + $0x34] sm:$0x1]
        %v2194 = vld [vmem:[%s901 + $0x38] sm:$0xf]
        %v2195 = vld [vmem:[%s901 + $0x3c] sm:$0x1]
        %v2197 = vshrl.u32 %v2180, 16
        %v2199 = vrot.slane %v2197, 4
        %v2200 = vshll.u32 %v2180, 16
        %v2202 = vrot.slane %v2200, 5
        %v2203 = vor.u32 %v2199, %v2202
        %v2204 = vrot.slane %v2203, 4
        %v2206 = vshll.u32 %v2181, 16
        %v2208 = vrot.slane %v2206, 5
        %v2209 = vsel %vm729, %v2204, %v2208
        %v2211 = vshrl.u32 %v2182, 16
        %v2213 = vrot.slane %v2211, 4
        %v2214 = vshll.u32 %v2182, 16
        %v2216 = vrot.slane %v2214, 5
        %v2217 = vor.u32 %v2213, %v2216
        %v2218 = vrot.slane %v2217, 4
        %v2220 = vshll.u32 %v2183, 16
        %v2222 = vrot.slane %v2220, 5
        %v2223 = vsel %vm729, %v2218, %v2222
        %v2225 = vshrl.u32 %v2184, 16
        %v2227 = vrot.slane %v2225, 4
        %v2228 = vshll.u32 %v2184, 16
        %v2230 = vrot.slane %v2228, 5
        %v2231 = vor.u32 %v2227, %v2230
        %v2232 = vrot.slane %v2231, 4
        %v2234 = vshll.u32 %v2185, 16
        %v2236 = vrot.slane %v2234, 5
        %v2237 = vsel %vm729, %v2232, %v2236
        %v2239 = vshrl.u32 %v2186, 16
        %v2241 = vrot.slane %v2239, 4
        %v2242 = vshll.u32 %v2186, 16
        %v2244 = vrot.slane %v2242, 5
        %v2245 = vor.u32 %v2241, %v2244
        %v2246 = vrot.slane %v2245, 4
        %v2248 = vshll.u32 %v2187, 16
        %v2250 = vrot.slane %v2248, 5
        %v2251 = vsel %vm729, %v2246, %v2250
        %v2253 = vshrl.u32 %v2188, 16
        %v2255 = vrot.slane %v2253, 4
        %v2256 = vshll.u32 %v2188, 16
        %v2258 = vrot.slane %v2256, 5
        %v2259 = vor.u32 %v2255, %v2258
        %v2260 = vrot.slane %v2259, 4
        %v2262 = vshll.u32 %v2189, 16
        %v2264 = vrot.slane %v2262, 5
        %v2265 = vsel %vm729, %v2260, %v2264
        %v2267 = vshrl.u32 %v2190, 16
        %v2269 = vrot.slane %v2267, 4
        %v2270 = vshll.u32 %v2190, 16
        %v2272 = vrot.slane %v2270, 5
        %v2273 = vor.u32 %v2269, %v2272
        %v2274 = vrot.slane %v2273, 4
        %v2276 = vshll.u32 %v2191, 16
        %v2278 = vrot.slane %v2276, 5
        %v2279 = vsel %vm729, %v2274, %v2278
        %v2281 = vshrl.u32 %v2192, 16
        %v2283 = vrot.slane %v2281, 4
        %v2284 = vshll.u32 %v2192, 16
        %v2286 = vrot.slane %v2284, 5
        %v2287 = vor.u32 %v2283, %v2286
        %v2288 = vrot.slane %v2287, 4
        %v2290 = vshll.u32 %v2193, 16
        %v2292 = vrot.slane %v2290, 5
        %v2293 = vsel %vm729, %v2288, %v2292
        %v2295 = vshrl.u32 %v2194, 16
        %v2297 = vrot.slane %v2295, 4
        %v2298 = vshll.u32 %v2194, 16
        %v2300 = vrot.slane %v2298, 5
        %v2301 = vor.u32 %v2297, %v2300
        %v2302 = vrot.slane %v2301, 4
        %v2304 = vshll.u32 %v2195, 16
        %v2306 = vrot.slane %v2304, 5
        %v2307 = vsel %vm729, %v2302, %v2306
        %v2308 = vld [vmem:[%s901] sm:$0xe]
        %v2309 = vld [vmem:[%s901 + $0x8] sm:$0xe]
        %v2310 = vld [vmem:[%s901 + $0x10] sm:$0xe]
        %v2311 = vld [vmem:[%s901 + $0x18] sm:$0xe]
        %v2312 = vld [vmem:[%s901 + $0x20] sm:$0xe]
        %v2313 = vld [vmem:[%s901 + $0x28] sm:$0xe]
        %v2314 = vld [vmem:[%s901 + $0x30] sm:$0xe]
        %v2315 = vld [vmem:[%s901 + $0x38] sm:$0xe]
        %v2332 = vrot.slane %v2308, 5
        %v2333 = vrot.slane %v2332, 4
        %v2334 = vrot.slane %v2181, 5
        %v2335 = vsel %vm868, %v2333, %v2334
        %v2336 = vrot.slane %v2309, 5
        %v2337 = vrot.slane %v2336, 4
        %v2338 = vrot.slane %v2183, 5
        %v2339 = vsel %vm868, %v2337, %v2338
        %v2340 = vrot.slane %v2310, 5
        %v2341 = vrot.slane %v2340, 4
        %v2342 = vrot.slane %v2185, 5
        %v2343 = vsel %vm868, %v2341, %v2342
        %v2344 = vrot.slane %v2311, 5
        %v2345 = vrot.slane %v2344, 4
        %v2346 = vrot.slane %v2187, 5
        %v2347 = vsel %vm868, %v2345, %v2346
        %v2348 = vrot.slane %v2312, 5
        %v2349 = vrot.slane %v2348, 4
        %v2350 = vrot.slane %v2189, 5
        %v2351 = vsel %vm868, %v2349, %v2350
        %v2352 = vrot.slane %v2313, 5
        %v2353 = vrot.slane %v2352, 4
        %v2354 = vrot.slane %v2191, 5
        %v2355 = vsel %vm868, %v2353, %v2354
        %v2356 = vrot.slane %v2314, 5
        %v2357 = vrot.slane %v2356, 4
        %v2358 = vrot.slane %v2193, 5
        %v2359 = vsel %vm868, %v2357, %v2358
        %v2360 = vrot.slane %v2315, 5
        %v2361 = vrot.slane %v2360, 4
        %v2362 = vrot.slane %v2195, 5
        %v2363 = vsel %vm868, %v2361, %v2362
        %v2364 = vld [vmem:[%s1086] sm:$0xf]
        %v2365 = vld [vmem:[%s1086 + $0x4] sm:$0x1]
        %v2366 = vld [vmem:[%s1086 + $0x8] sm:$0xf]
        %v2367 = vld [vmem:[%s1086 + $0xc] sm:$0x1]
        %v2368 = vld [vmem:[%s1086 + $0x10] sm:$0xf]
        %v2369 = vld [vmem:[%s1086 + $0x14] sm:$0x1]
        %v2370 = vld [vmem:[%s1086 + $0x18] sm:$0xf]
        %v2371 = vld [vmem:[%s1086 + $0x1c] sm:$0x1]
        %v2372 = vld [vmem:[%s1086 + $0x20] sm:$0xf]
        %v2373 = vld [vmem:[%s1086 + $0x24] sm:$0x1]
        %v2374 = vld [vmem:[%s1086 + $0x28] sm:$0xf]
        %v2375 = vld [vmem:[%s1086 + $0x2c] sm:$0x1]
        %v2376 = vld [vmem:[%s1086 + $0x30] sm:$0xf]
        %v2377 = vld [vmem:[%s1086 + $0x34] sm:$0x1]
        %v2378 = vld [vmem:[%s1086 + $0x38] sm:$0xf]
        %v2379 = vld [vmem:[%s1086 + $0x3c] sm:$0x1]
        %v2381 = vshrl.u32 %v2364, 16
        %v2383 = vrot.slane %v2381, 4
        %v2384 = vshll.u32 %v2364, 16
        %v2386 = vrot.slane %v2384, 5
        %v2387 = vor.u32 %v2383, %v2386
        %v2388 = vrot.slane %v2387, 4
        %v2390 = vshll.u32 %v2365, 16
        %v2392 = vrot.slane %v2390, 5
        %v2393 = vsel %vm729, %v2388, %v2392
        %v2395 = vshrl.u32 %v2366, 16
        %v2397 = vrot.slane %v2395, 4
        %v2398 = vshll.u32 %v2366, 16
        %v2400 = vrot.slane %v2398, 5
        %v2401 = vor.u32 %v2397, %v2400
        %v2402 = vrot.slane %v2401, 4
        %v2404 = vshll.u32 %v2367, 16
        %v2406 = vrot.slane %v2404, 5
        %v2407 = vsel %vm729, %v2402, %v2406
        %v2409 = vshrl.u32 %v2368, 16
        %v2411 = vrot.slane %v2409, 4
        %v2412 = vshll.u32 %v2368, 16
        %v2414 = vrot.slane %v2412, 5
        %v2415 = vor.u32 %v2411, %v2414
        %v2416 = vrot.slane %v2415, 4
        %v2418 = vshll.u32 %v2369, 16
        %v2420 = vrot.slane %v2418, 5
        %v2421 = vsel %vm729, %v2416, %v2420
        %v2423 = vshrl.u32 %v2370, 16
        %v2425 = vrot.slane %v2423, 4
        %v2426 = vshll.u32 %v2370, 16
        %v2428 = vrot.slane %v2426, 5
        %v2429 = vor.u32 %v2425, %v2428
        %v2430 = vrot.slane %v2429, 4
        %v2432 = vshll.u32 %v2371, 16
        %v2434 = vrot.slane %v2432, 5
        %v2435 = vsel %vm729, %v2430, %v2434
        %v2437 = vshrl.u32 %v2372, 16
        %v2439 = vrot.slane %v2437, 4
        %v2440 = vshll.u32 %v2372, 16
        %v2442 = vrot.slane %v2440, 5
        %v2443 = vor.u32 %v2439, %v2442
        %v2444 = vrot.slane %v2443, 4
        %v2446 = vshll.u32 %v2373, 16
        %v2448 = vrot.slane %v2446, 5
        %v2449 = vsel %vm729, %v2444, %v2448
        %v2451 = vshrl.u32 %v2374, 16
        %v2453 = vrot.slane %v2451, 4
        %v2454 = vshll.u32 %v2374, 16
        %v2456 = vrot.slane %v2454, 5
        %v2457 = vor.u32 %v2453, %v2456
        %v2458 = vrot.slane %v2457, 4
        %v2460 = vshll.u32 %v2375, 16
        %v2462 = vrot.slane %v2460, 5
        %v2463 = vsel %vm729, %v2458, %v2462
        %v2465 = vshrl.u32 %v2376, 16
        %v2467 = vrot.slane %v2465, 4
        %v2468 = vshll.u32 %v2376, 16
        %v2470 = vrot.slane %v2468, 5
        %v2471 = vor.u32 %v2467, %v2470
        %v2472 = vrot.slane %v2471, 4
        %v2474 = vshll.u32 %v2377, 16
        %v2476 = vrot.slane %v2474, 5
        %v2477 = vsel %vm729, %v2472, %v2476
        %v2479 = vshrl.u32 %v2378, 16
        %v2481 = vrot.slane %v2479, 4
        %v2482 = vshll.u32 %v2378, 16
        %v2484 = vrot.slane %v2482, 5
        %v2485 = vor.u32 %v2481, %v2484
        %v2486 = vrot.slane %v2485, 4
        %v2488 = vshll.u32 %v2379, 16
        %v2490 = vrot.slane %v2488, 5
        %v2491 = vsel %vm729, %v2486, %v2490
        %v2492 = vld [vmem:[%s1086] sm:$0xe]
        %v2493 = vld [vmem:[%s1086 + $0x8] sm:$0xe]
        %v2494 = vld [vmem:[%s1086 + $0x10] sm:$0xe]
        %v2495 = vld [vmem:[%s1086 + $0x18] sm:$0xe]
        %v2496 = vld [vmem:[%s1086 + $0x20] sm:$0xe]
        %v2497 = vld [vmem:[%s1086 + $0x28] sm:$0xe]
        %v2498 = vld [vmem:[%s1086 + $0x30] sm:$0xe]
        %v2499 = vld [vmem:[%s1086 + $0x38] sm:$0xe]
        %v2516 = vrot.slane %v2492, 5
        %v2517 = vrot.slane %v2516, 4
        %v2518 = vrot.slane %v2365, 5
        %v2519 = vsel %vm868, %v2517, %v2518
        %v2520 = vrot.slane %v2493, 5
        %v2521 = vrot.slane %v2520, 4
        %v2522 = vrot.slane %v2367, 5
        %v2523 = vsel %vm868, %v2521, %v2522
        %v2524 = vrot.slane %v2494, 5
        %v2525 = vrot.slane %v2524, 4
        %v2526 = vrot.slane %v2369, 5
        %v2527 = vsel %vm868, %v2525, %v2526
        %v2528 = vrot.slane %v2495, 5
        %v2529 = vrot.slane %v2528, 4
        %v2530 = vrot.slane %v2371, 5
        %v2531 = vsel %vm868, %v2529, %v2530
        %v2532 = vrot.slane %v2496, 5
        %v2533 = vrot.slane %v2532, 4
        %v2534 = vrot.slane %v2373, 5
        %v2535 = vsel %vm868, %v2533, %v2534
        %v2536 = vrot.slane %v2497, 5
        %v2537 = vrot.slane %v2536, 4
        %v2538 = vrot.slane %v2375, 5
        %v2539 = vsel %vm868, %v2537, %v2538
        %v2540 = vrot.slane %v2498, 5
        %v2541 = vrot.slane %v2540, 4
        %v2542 = vrot.slane %v2377, 5
        %v2543 = vsel %vm868, %v2541, %v2542
        %v2544 = vrot.slane %v2499, 5
        %v2545 = vrot.slane %v2544, 4
        %v2546 = vrot.slane %v2379, 5
        %v2547 = vsel %vm868, %v2545, %v2546
        %v2548 = vunpack.c.l.b16 %v2209
        %v2549 = vunpack.c.l.b16 %v2223
        %v2550 = vunpack.c.l.b16 %v2237
        %v2551 = vunpack.c.l.b16 %v2251
        %v2552 = vunpack.c.l.b16 %v2265
        %v2553 = vunpack.c.l.b16 %v2279
        %v2554 = vunpack.c.l.b16 %v2293
        %v2555 = vunpack.c.l.b16 %v2307
        %v2556 = vpack.c.b16 %v2549, %v2548
        %v2557 = vpack.c.b16 %v2551, %v2550
        %v2558 = vpack.c.b16 %v2553, %v2552
        %v2559 = vpack.c.b16 %v2555, %v2554
        %v2560 = vunpack.c.l.b16 %v2335
        %v2561 = vunpack.c.l.b16 %v2339
        %v2562 = vunpack.c.l.b16 %v2343
        %v2563 = vunpack.c.l.b16 %v2347
        %v2564 = vunpack.c.l.b16 %v2351
        %v2565 = vunpack.c.l.b16 %v2355
        %v2566 = vunpack.c.l.b16 %v2359
        %v2567 = vunpack.c.l.b16 %v2363
        %v2568 = vpack.c.b16 %v2561, %v2560
        %v2569 = vpack.c.b16 %v2563, %v2562
        %v2570 = vpack.c.b16 %v2565, %v2564
        %v2571 = vpack.c.b16 %v2567, %v2566
        %2572 = vrot.lane.b32.xlu0 %v2568, 64
        %v2573 = vpop.permute.xlu0 %2572
        %2574 = vrot.lane.b32.xlu0 %v2569, 64
        %v2575 = vpop.permute.xlu0 %2574
        %2576 = vrot.lane.b32.xlu0 %v2570, 64
        %v2577 = vpop.permute.xlu0 %2576
        %2578 = vrot.lane.b32.xlu0 %v2571, 64
        %v2579 = vpop.permute.xlu0 %2578
        %v2580 = vunpack.c.l.b16 %v2393
        %v2581 = vunpack.c.l.b16 %v2407
        %v2582 = vunpack.c.l.b16 %v2421
        %v2583 = vunpack.c.l.b16 %v2435
        %v2584 = vunpack.c.l.b16 %v2449
        %v2585 = vunpack.c.l.b16 %v2463
        %v2586 = vunpack.c.l.b16 %v2477
        %v2587 = vunpack.c.l.b16 %v2491
        %v2588 = vpack.c.b16 %v2581, %v2580
        %v2589 = vpack.c.b16 %v2583, %v2582
        %v2590 = vpack.c.b16 %v2585, %v2584
        %v2591 = vpack.c.b16 %v2587, %v2586
        %v2592 = vunpack.c.l.b16 %v2519
        %v2593 = vunpack.c.l.b16 %v2523
        %v2594 = vunpack.c.l.b16 %v2527
        %v2595 = vunpack.c.l.b16 %v2531
        %v2596 = vunpack.c.l.b16 %v2535
        %v2597 = vunpack.c.l.b16 %v2539
        %v2598 = vunpack.c.l.b16 %v2543
        %v2599 = vunpack.c.l.b16 %v2547
        %v2600 = vpack.c.b16 %v2593, %v2592
        %v2601 = vpack.c.b16 %v2595, %v2594
        %v2602 = vpack.c.b16 %v2597, %v2596
        %v2603 = vpack.c.b16 %v2599, %v2598
        %2604 = vrot.lane.b32.xlu0 %v2600, 64
        %v2605 = vpop.permute.xlu0 %2604
        %2606 = vrot.lane.b32.xlu0 %v2601, 64
        %v2607 = vpop.permute.xlu0 %2606
        %2608 = vrot.lane.b32.xlu0 %v2602, 64
        %v2609 = vpop.permute.xlu0 %2608
        %2610 = vrot.lane.b32.xlu0 %v2603, 64
        %v2611 = vpop.permute.xlu0 %2610
        %v2614 = vsel %vm1435, %v2556, %v2573
        %v2618 = vsel %vm1435, %v2557, %v2575
        %v2622 = vsel %vm1435, %v2558, %v2577
        %v2626 = vsel %vm1435, %v2559, %v2579
        %v2630 = vsel %vm1435, %v2588, %v2605
        %v2634 = vsel %vm1435, %v2589, %v2607
        %v2638 = vsel %vm1435, %v2590, %v2609
        %v2642 = vsel %vm1435, %v2591, %v2611
        %v2644 = vld [vmem:[%s6] sm:$0xf]
        %v2645 = vld [vmem:[%s6 + $0x4] sm:$0xf]
        %v2646 = vld [vmem:[%s6 + $0x8] sm:$0xf]
        %v2647 = vld [vmem:[%s6 + $0xc] sm:$0xf]
        %v2648 = vld [vmem:[%s6 + $0x10] sm:$0xf]
        %v2649 = vld [vmem:[%s6 + $0x14] sm:$0xf]
        %v2650 = vld [vmem:[%s6 + $0x18] sm:$0xf]
        %v2651 = vld [vmem:[%s6 + $0x1c] sm:$0xf]
        %v2652 = vld [vmem:[%s6 + $0x20] sm:$0xf]
        %v2653 = vld [vmem:[%s6 + $0x24] sm:$0xf]
        %v2654 = vld [vmem:[%s6 + $0x28] sm:$0xf]
        %v2655 = vld [vmem:[%s6 + $0x2c] sm:$0xf]
        %v2656 = vld [vmem:[%s6 + $0x30] sm:$0xf]
        %v2657 = vld [vmem:[%s6 + $0x34] sm:$0xf]
        %v2658 = vld [vmem:[%s6 + $0x38] sm:$0xf]
        %v2659 = vld [vmem:[%s6 + $0x3c] sm:$0xf]
        %v2660 = vld [vmem:[%s6 + $0x40] sm:$0xf]
        %v2661 = vld [vmem:[%s6 + $0x44] sm:$0xf]
        %v2662 = vld [vmem:[%s6 + $0x48] sm:$0xf]
        %v2663 = vld [vmem:[%s6 + $0x4c] sm:$0xf]
        %v2664 = vld [vmem:[%s6 + $0x50] sm:$0xf]
        %v2665 = vld [vmem:[%s6 + $0x54] sm:$0xf]
        %v2666 = vld [vmem:[%s6 + $0x58] sm:$0xf]
        %v2667 = vld [vmem:[%s6 + $0x5c] sm:$0xf]
        %v2668 = vld [vmem:[%s6 + $0x60] sm:$0xf]
        %v2669 = vld [vmem:[%s6 + $0x64] sm:$0xf]
        %v2670 = vld [vmem:[%s6 + $0x68] sm:$0xf]
        %v2671 = vld [vmem:[%s6 + $0x6c] sm:$0xf]
        %v2672 = vld [vmem:[%s6 + $0x70] sm:$0xf]
        %v2673 = vld [vmem:[%s6 + $0x74] sm:$0xf]
        %v2674 = vld [vmem:[%s6 + $0x78] sm:$0xf]
        %v2675 = vld [vmem:[%s6 + $0x7c] sm:$0xf]
        %v2676 = vld [vmem:[%s7] sm:$0x1]
        %v2678 = vlaneseq
        %v2679 = vshrl.u32 %v2678, 7
        %v2680 = vsub.s32 0, %v2679
        %v2681 = vrot.slane %v2676, %v2680
        %v2715 = vunpack.c.l.b16 %v2644
        %v2716 = vunpack.c.l.b16 %v2645
        %v2717 = vunpack.c.l.b16 %v2646
        %v2718 = vunpack.c.l.b16 %v2647
        %v2719 = vunpack.c.l.b16 %v2648
        %v2720 = vunpack.c.l.b16 %v2649
        %v2721 = vunpack.c.l.b16 %v2650
        %v2722 = vunpack.c.l.b16 %v2651
        %v2723 = vunpack.c.l.b16 %v2652
        %v2724 = vunpack.c.l.b16 %v2653
        %v2725 = vunpack.c.l.b16 %v2654
        %v2726 = vunpack.c.l.b16 %v2655
        %v2727 = vunpack.c.l.b16 %v2656
        %v2728 = vunpack.c.l.b16 %v2657
        %v2729 = vunpack.c.l.b16 %v2658
        %v2730 = vunpack.c.l.b16 %v2659
        %v2731 = vunpack.c.l.b16 %v2660
        %v2732 = vunpack.c.l.b16 %v2661
        %v2733 = vunpack.c.l.b16 %v2662
        %v2734 = vunpack.c.l.b16 %v2663
        %v2735 = vunpack.c.l.b16 %v2664
        %v2736 = vunpack.c.l.b16 %v2665
        %v2737 = vunpack.c.l.b16 %v2666
        %v2738 = vunpack.c.l.b16 %v2667
        %v2739 = vunpack.c.l.b16 %v2668
        %v2740 = vunpack.c.l.b16 %v2669
        %v2741 = vunpack.c.l.b16 %v2670
        %v2742 = vunpack.c.l.b16 %v2671
        %v2743 = vunpack.c.l.b16 %v2672
        %v2744 = vunpack.c.l.b16 %v2673
        %v2745 = vunpack.c.l.b16 %v2674
        %v2746 = vunpack.c.l.b16 %v2675
        %v2747 = vpack.c.b16 %v2716, %v2715
        %v2748 = vpack.c.b16 %v2718, %v2717
        %v2749 = vpack.c.b16 %v2720, %v2719
        %v2750 = vpack.c.b16 %v2722, %v2721
        %v2751 = vpack.c.b16 %v2724, %v2723
        %v2752 = vpack.c.b16 %v2726, %v2725
        %v2753 = vpack.c.b16 %v2728, %v2727
        %v2754 = vpack.c.b16 %v2730, %v2729
        %v2755 = vpack.c.b16 %v2732, %v2731
        %v2756 = vpack.c.b16 %v2734, %v2733
        %v2757 = vpack.c.b16 %v2736, %v2735
        %v2758 = vpack.c.b16 %v2738, %v2737
        %v2759 = vpack.c.b16 %v2740, %v2739
        %v2760 = vpack.c.b16 %v2742, %v2741
        %v2761 = vpack.c.b16 %v2744, %v2743
        %v2762 = vpack.c.b16 %v2746, %v2745
        %2779 = vmatprep.subr.bf16.mxu0 0
        %2780 = vmatpush1.bf16.msra.mxu0 %v2754
        %2781 = vmatprep.subr.bf16.mxu0 0
        %2782 = vmatpush1.bf16.msra.mxu0 %v2753
        %2783 = vmatprep.subr.bf16.mxu0 0
        %2784 = vmatpush1.bf16.msra.mxu0 %v2752
        %2785 = vmatprep.subr.bf16.mxu0 0
        %2786 = vmatpush1.bf16.msra.mxu0 %v2751
        %2787 = vmatprep.subr.bf16.mxu0 0
        %2788 = vmatpush1.bf16.msra.mxu0 %v2750
        %2789 = vmatprep.subr.bf16.mxu0 0
        %2790 = vmatpush1.bf16.msra.mxu0 %v2749
        %2791 = vmatprep.subr.bf16.mxu0 0
        %2792 = vmatpush1.bf16.msra.mxu0 %v2748
        %2793 = vmatprep.subr.bf16.mxu0 0
        %2794 = vmatpush1.bf16.msra.mxu0 %v2747
        %2795 = vmatprep.subr.bf16.mxu0 0
        %2796 = vmatpush2.bf16.msra.mxu0 %v2762
        %2797 = vmatprep.subr.bf16.mxu0 0
        %2798 = vmatpush2.bf16.msra.mxu0 %v2761
        %2799 = vmatprep.subr.bf16.mxu0 0
        %2800 = vmatpush2.bf16.msra.mxu0 %v2760
        %2801 = vmatprep.subr.bf16.mxu0 0
        %2802 = vmatpush2.bf16.msra.mxu0 %v2759
        %2803 = vmatprep.subr.bf16.mxu0 0
        %2804 = vmatpush2.bf16.msra.mxu0 %v2758
        %2805 = vmatprep.subr.bf16.mxu0 0
        %2806 = vmatpush2.bf16.msra.mxu0 %v2757
        %2807 = vmatprep.subr.bf16.mxu0 0
        %2808 = vmatpush2.bf16.msra.mxu0 %v2756
        %2809 = vmatprep.subr.bf16.mxu0 0
        %2810 = vmatpush2.bf16.msra.mxu0 %v2755
        %2811 = vmatprep.mubr.bf16.mxu0 %v2630
        %2812 = vmatmul.mubr.bf16.gmra.mxu0 %v2614
        %v2813 = vpop.f32.mrf.mxu0
        %v2814 = vadd.f32 %v2681, %v2813
        %v2815 = vpop.f32.mrf.mxu0
        %v2816 = vpop.f32.mrf.mxu0
        %v2817 = vadd.f32 %v2681, %v2816
        %v2818 = vpop.f32.mrf.mxu0
        %2819 = vmatprep.mubr.bf16.mxu0 %v2634
        %2820 = vmatmul.mubr.bf16.gmra.mxu0 %v2618
        %v2821 = vpop.f32.mrf.mxu0
        %v2822 = vadd.f32 %v2681, %v2821
        %v2823 = vpop.f32.mrf.mxu0
        %v2824 = vpop.f32.mrf.mxu0
        %v2825 = vadd.f32 %v2681, %v2824
        %v2826 = vpop.f32.mrf.mxu0
        %2827 = vmatprep.mubr.bf16.mxu0 %v2638
        %2828 = vmatmul.mubr.bf16.gmra.mxu0 %v2622
        %v2829 = vpop.f32.mrf.mxu0
        %v2830 = vadd.f32 %v2681, %v2829
        %v2831 = vpop.f32.mrf.mxu0
        %v2832 = vpop.f32.mrf.mxu0
        %v2833 = vadd.f32 %v2681, %v2832
        %v2834 = vpop.f32.mrf.mxu0
        %2835 = vmatprep.mubr.bf16.mxu0 %v2642
        %2836 = vmatmul.mubr.bf16.gmra.mxu0 %v2626
        %v2837 = vpop.f32.mrf.mxu0
        %v2838 = vadd.f32 %v2681, %v2837
        %v2839 = vpop.f32.mrf.mxu0
        %v2840 = vpop.f32.mrf.mxu0
        %v2841 = vadd.f32 %v2681, %v2840
        %v2842 = vpop.f32.mrf.mxu0
        %2843 = vdwg.mxu0
        %v2844 = vld [vmem:[%s347] sm:$0xff]
        %v2845 = vld [vmem:[%s347 + $0x8] sm:$0xff]
        %v2846 = vld [vmem:[%s347 + $0x10] sm:$0xff]
        %v2847 = vld [vmem:[%s347 + $0x18] sm:$0xff]
        %v2848 = vld [vmem:[%s347 + $0x20] sm:$0xff]
        %v2849 = vld [vmem:[%s347 + $0x28] sm:$0xff]
        %v2850 = vld [vmem:[%s347 + $0x30] sm:$0xff]
        %v2851 = vld [vmem:[%s347 + $0x38] sm:$0xff]
        %v2852 = vadd.f32 %v2814, %v2844
        %v2853 = vadd.f32 %v2817, %v2845
        %v2854 = vadd.f32 %v2822, %v2846
        %v2855 = vadd.f32 %v2825, %v2847
        %v2856 = vadd.f32 %v2830, %v2848
        %v2857 = vadd.f32 %v2833, %v2849
        %v2858 = vadd.f32 %v2838, %v2850
        %v2859 = vadd.f32 %v2841, %v2851
        %v2860 = vmax.f32 %v2852, 0.0
        %v2861 = vmax.f32 %v2853, 0.0
        %v2862 = vmax.f32 %v2854, 0.0
        %v2863 = vmax.f32 %v2855, 0.0
        %v2864 = vmax.f32 %v2856, 0.0
        %v2865 = vmax.f32 %v2857, 0.0
        %v2866 = vmax.f32 %v2858, 0.0
        %v2867 = vmax.f32 %v2859, 0.0
        %vm2868 = vcmask 31744
        %2869 = vst.msk [vmem:[%s357] sm:$0xff] %vm2868, %v2860
        %2870 = vst.msk [vmem:[%s357 + $0x8] sm:$0xff] %vm2868, %v2861
        %2871 = vst.msk [vmem:[%s357 + $0x10] sm:$0xff] %vm2868, %v2862
        %2872 = vst.msk [vmem:[%s357 + $0x18] sm:$0xff] %vm2868, %v2863
        %2873 = vst.msk [vmem:[%s357 + $0x20] sm:$0xff] %vm2868, %v2864
        %2874 = vst.msk [vmem:[%s357 + $0x28] sm:$0xff] %vm2868, %v2865
        %2875 = vst.msk [vmem:[%s357 + $0x30] sm:$0xff] %vm2868, %v2866
        %2876 = vst.msk [vmem:[%s357 + $0x38] sm:$0xff] %vm2868, %v2867
      $region60: #{rednet30_forward.1} parent=51 // pred_fallthru
        _
      %p2877 = scmp.lt.s32.totalorder %s23, 1
      %s2878 = scalar_select %p2877, %s23, 1
      %s2879 = smul.addr %s2878, 8
      %s2880 = smul.addr %s2879, 8
      %s2881 = scalar_lea.vmem %s8, %s2880
      // Predicated region
      $region61: #{rednet30_forward.1} parent=51 // pred_check
        %p2882 = pneg %p232
      $region62: #{rednet30_forward.1} parent=51 // pred_check_branch
        %2884 = sbr.rel (%p2882) target = $region64
      $region63: #{rednet30_forward.1} parent=51 // pred_region
        _
      $region64: #{rednet30_forward.1} parent=51 // pred_fallthru
        _
    $region52: #{rednet30_forward.1} parent=5 // pred_fallthru
      _
    %p2885 = scmp.le.s32.totalorder 2, %s14
    // Predicated region
    $region65: #{rednet30_forward.1} parent=5 // pred_check
      %p2886 = pneg %p2885
    $region66: #{rednet30_forward.1} parent=5 // pred_check_branch
      %2888 = sbr.rel (%p2886) target = $region68
    $region67: #{rednet30_forward.1} parent=5 // pred_region
      %s2889 = ssub.s32 %s14, 2
      // Predicated region
      $region69: #{rednet30_forward.1} parent=67 // pred_check
        %p2890 = pneg %p238
      $region70: #{rednet30_forward.1} parent=67 // pred_check_branch
        %2892 = sbr.rel (%p2890) target = $region72
      $region71: #{rednet30_forward.1} parent=67 // pred_region
        %p2893 = scmp.lt.s32.totalorder %s25, 1
        %s2894 = scalar_select %p2893, %s25, 1
        %s2895 = smul.addr %s2894, 8
        %s2896 = smul.addr %s2895, 8
        %s2897 = scalar_lea.vmem %s8, %s2896
      $region72: #{rednet30_forward.1} parent=67 // pred_fallthru
        _
    $region68: #{rednet30_forward.1} parent=5 // pred_fallthru
      _
  $region6: #{rednet30_forward.1} parent=0 // loop_footer
    %s18 = sadd.s32 1, %s14
  $region7: #{rednet30_forward.1} parent=0 // loop_footer_branch
    %13 = sbr.rel target = $region3
  $region8: #{rednet30_forward.1} parent=0 // loop_exit
    _

</llo_original>
